<compile_context>
chip_gen: v5e
topology: v5e:2x2
jax: 0.10.0
libtpu: 0.0.40
codegen_flags: <defaults>
</compile_context>

<pallas_src>
import numpy as np
import jax
import jax.numpy as jnp
from jax.experimental import pallas as pl
from jax.experimental.pallas import tpu as pltpu

# Small, module-consistent shapes.
B, S, D = 2, 8, 32          # batch, seq_len, model_dim
H = 4                       # num_heads
HD = D // H                 # head_dim
HID = D // 4                # entropy-scaler hidden dim (model_dim // 4)
BS = B * S
EPS = 1e-5                  # LayerNorm eps (PyTorch default)


def entropy_attention_kernel(x_ref, stats_ref, w_ref, p_ref, out_ref, qkv_ref):
    """x_ref:[BS,D]  stats_ref:[B,5]  w_ref:[D,4D]  p_ref:[8,4D]  out:[BS,D].

    w_ref columns:  [ wq*scale | wk | wv | wo ]
    p_ref rows:     0: [ bq*scale | bk | bv | bo ]
                    1: [ ln_gamma | ln_beta | b1 (HID) | b2 (1) | 0... ]
                    2..6: w1 (5 x HID) in columns 0:HID
                    7: w2^T (1 x HID) in columns 0:HID
    qkv_ref: (BS, 3D) f32 VMEM scratch staging the fused QKV projection so the
             per-head 8-lane views are cheap ref loads, not lane relayouts.
    """
    f32 = jnp.float32

    # ---- parameter views (loaded once) ----
    b_qkv = p_ref[0:1, 0:3 * D]                               # [1, 3D]
    bo = p_ref[0:1, 3 * D:4 * D]                              # [1, D]
    gamma = p_ref[1:2, 0:D]                                   # [1, D]
    beta = p_ref[1:2, D:2 * D]                                # [1, D]
    b1 = p_ref[1:2, 2 * D:2 * D + HID]                        # [1, HID]
    b2 = p_ref[1:2, 2 * D + HID:2 * D + HID + 1]              # [1, 1]
    w1 = p_ref[2:2 + 5, 0:HID]                                # [5, HID]
    w2_row = p_ref[7:8, 0:HID]                                # [1, HID]

    # ---- entropy scaler MLP on raw [B, 5] stats -> [B, 1] ----
    hdn = jnp.maximum(
        jnp.dot(stats_ref[...], w1, preferred_element_type=f32) + b1, 0.0)
    ent = jax.nn.sigmoid(jnp.sum(hdn * w2_row, axis=-1, keepdims=True) + b2)  # [B,1]

    # ---- fused QKV projection (one MXU push; 1/sqrt(HD) pre-folded into wq/bq),
    #      staged through VMEM so head slices become static ref-view loads. ----
    qkv_ref[...] = (jnp.dot(x_ref[...], w_ref[:, 0:3 * D],
                            preferred_element_type=f32) + b_qkv)             # [BS,3D]

    nt = (((1,), (1,)), ((), ()))     # contract last dims: q @ k^T w/o transpose
    for b in range(B):
        r0, r1 = b * S, (b + 1) * S
        acc = None                    # per-batch out-projected accumulator [S, D]
        for h in range(H):
            c = h * HD
            qh = qkv_ref[r0:r1, c:c + HD]                     # already * 1/sqrt(HD)
            kh = qkv_ref[r0:r1, D + c:D + c + HD]
            vh = qkv_ref[r0:r1, 2 * D + c:2 * D + c + HD]
            s = jax.lax.dot_general(qh, kh, nt, preferred_element_type=f32)   # [S,S]
            s = s - jnp.max(s, axis=-1, keepdims=True)
            p = jnp.exp(s)
            den = jnp.sum(p, axis=-1, keepdims=True)
            r = pl.reciprocal(den, approx=True)               # EUP slot
            r = r * (2.0 - den * r)                           # one Newton step (~1e-7)
            p = p * r
            attn_h = jnp.dot(p, vh, preferred_element_type=f32)              # [S,HD]
            # out-projection folded into the head loop: no column scratch stores
            contrib = jnp.dot(attn_h, w_ref[c:c + HD, 3 * D:4 * D],
                              preferred_element_type=f32)                    # [S,D]
            acc = contrib if acc is None else acc + contrib

        # ---- per-batch epilogue: bias, entropy scale, residual, LayerNorm ----
        attended = (acc + bo) * ent[b:b + 1, 0:1]             # dropout = identity (eval)
        y = x_ref[r0:r1, :] + attended
        mu = jnp.mean(y, axis=-1, keepdims=True)
        var = jnp.mean((y - mu) * (y - mu), axis=-1, keepdims=True)
        out_ref[r0:r1, :] = (y - mu) * jax.lax.rsqrt(var + EPS) * gamma + beta


def pack_params(params):
    """One-time packing of the 14 module parameters into 2 slabs (hoisted out
    of the per-call path — at BS=16 the wrapper packing ops would otherwise
    dominate wall-clock)."""
    (w1, b1, w2, b2, wq, bq, wk, bk, wv, bv, wo, bo, ln_g, ln_b) = params
    scale = jnp.float32(1.0 / np.sqrt(HD))

    # Weight slab [D, 4D]: wq (pre-scaled) | wk | wv | wo.
    w_slab = jnp.concatenate([wq * scale, wk, wv, wo], axis=1)          # [32, 128]

    # Row slab [8, 4D]: biases / LayerNorm affine / entropy-MLP params.
    row0 = jnp.concatenate([bq * scale, bk, bv, bo], axis=1)            # [1, 128]
    row1 = jnp.zeros((1, 4 * D), jnp.float32)
    row1 = row1.at[:, 0:D].set(ln_g)
    row1 = row1.at[:, D:2 * D].set(ln_b)
    row1 = row1.at[:, 2 * D:2 * D + HID].set(b1)
    row1 = row1.at[:, 2 * D + HID:2 * D + HID + 1].set(b2)
    w1_rows = jnp.zeros((5, 4 * D), jnp.float32).at[:, 0:HID].set(w1)   # [5, 128]
    w2_row = jnp.zeros((1, 4 * D), jnp.float32).at[:, 0:HID].set(w2.T)  # [1, 128]
    p_slab = jnp.concatenate([row0, row1, w1_rows, w2_row], axis=0)     # [8, 128]
    return w_slab, p_slab


@jax.jit
def entropy_aware_attention(x, stats, w_slab, p_slab):
    """Per-call path: reshape + single Pallas launch (params pre-packed)."""
    x_flat = x.reshape(BS, D)                                           # [16, 32]
    vmem = pl.BlockSpec(memory_space=pltpu.MemorySpace.VMEM)
    out = pl.pallas_call(
        entropy_attention_kernel,
        out_shape=jax.ShapeDtypeStruct((BS, D), jnp.float32),
        in_specs=[vmem, vmem, vmem, vmem],
        out_specs=vmem,
        scratch_shapes=[pltpu.VMEM((BS, 3 * D), jnp.float32)],
    )(x_flat, stats, w_slab, p_slab)
    return out.reshape(B, S, D)


def reference(x, stats, params):
    """Pure-JAX reference mirroring torch semantics (eval mode)."""
    (w1, b1, w2, b2, wq, bq, wk, bk, wv, bv, wo, bo, ln_g, ln_b) = params
    ent = jax.nn.sigmoid(jnp.maximum(stats @ w1 + b1, 0.0) @ w2 + b2)   # [B,1]
    q = x @ wq + bq
    k = x @ wk + bk
    v = x @ wv + bv
    q = q.reshape(B, S, H, HD).transpose(0, 2, 1, 3) / jnp.sqrt(HD)
    k = k.reshape(B, S, H, HD).transpose(0, 2, 1, 3)
    v = v.reshape(B, S, H, HD).transpose(0, 2, 1, 3)
    sc = jnp.einsum('bhqd,bhkd->bhqk', q, k)
    p = jax.nn.softmax(sc, axis=-1)
    o = jnp.einsum('bhqk,bhkd->bhqd', p, v).transpose(0, 2, 1, 3).reshape(B, S, D)
    attended = (o @ wo + bo) * ent[:, None, :]
    y = x + attended
    mu = jnp.mean(y, axis=-1, keepdims=True)
    var = jnp.mean((y - mu) ** 2, axis=-1, keepdims=True)
    return (y - mu) / jnp.sqrt(var + EPS) * ln_g + ln_b


if __name__ == "__main__":
    key = jax.random.PRNGKey(0)
    ks = jax.random.split(key, 12)

    # Deterministic synthetic parameters (shapes from the module's __init__).
    w1 = jax.random.normal(ks[0], (5, HID), jnp.float32) * 0.2       # Linear(5, D//4)
    b1 = jax.random.normal(ks[1], (1, HID), jnp.float32) * 0.1
    w2 = jax.random.normal(ks[2], (HID, 1), jnp.float32) * 0.2       # Linear(D//4, 1)
    b2 = jax.random.normal(ks[3], (1, 1), jnp.float32) * 0.1
    # MultiheadAttention in_proj_weight [3D, D] split + transposed -> (D, D) each.
    in_proj = jax.random.normal(ks[4], (3 * D, D), jnp.float32) * 0.1
    in_bias = jax.random.normal(ks[5], (3 * D,), jnp.float32) * 0.05
    wq, wk, wv = in_proj[:D].T, in_proj[D:2 * D].T, in_proj[2 * D:].T
    bq, bk, bv = (in_bias[:D].reshape(1, D), in_bias[D:2 * D].reshape(1, D),
                  in_bias[2 * D:].reshape(1, D))
    wo = jax.random.normal(ks[6], (D, D), jnp.float32).T * 0.1       # out_proj Linear(D, D)
    bo = jax.random.normal(ks[7], (1, D), jnp.float32) * 0.05
    ln_g = jnp.ones((1, D), jnp.float32)                             # LayerNorm weight
    ln_b = jnp.zeros((1, D), jnp.float32)                            # LayerNorm bias

    params = (w1, b1, w2, b2, wq, bq, wk, bk, wv, bv, wo, bo, ln_g, ln_b)

    x = jax.random.normal(ks[8], (B, S, D), jnp.float32)
    stats = jax.random.normal(ks[9], (B, 5), jnp.float32)

    # One-time parameter packing (outside the per-call path).
    w_slab, p_slab = jax.block_until_ready(pack_params(params))

    out = entropy_aware_attention(x, stats, w_slab, p_slab)
    out = jax.block_until_ready(out)

    ref = reference(x, stats, params)
    np.testing.assert_allclose(np.asarray(out), np.asarray(ref), rtol=1e-4, atol=1e-4)

    print("KERNEL_OK")
</pallas_src>

<mosaic_0001>
module attributes {stable_mosaic.version = 11 : i64} {
  func.func @entropy_attention_kernel(%arg0: memref<16x32xf32, #tpu.memory_space<vmem>>, %arg1: memref<2x5xf32, #tpu.memory_space<vmem>>, %arg2: memref<32x128xf32, #tpu.memory_space<vmem>>, %arg3: memref<8x128xf32, #tpu.memory_space<vmem>>, %arg4: memref<16x32xf32, #tpu.memory_space<vmem>>, %arg5: memref<16x96xf32, #tpu.memory_space<vmem>>) attributes {dimension_semantics = [], scalar_prefetch = 0 : i64, scratch_operands = 1 : i64, tpu.core_type = #tpu.core_type<tc>} {
    %c0 = arith.constant 0 : index
    %c0_0 = arith.constant 0 : index
    %0 = vector.load %arg3[%c0, %c0_0] : memref<8x128xf32, #tpu.memory_space<vmem>>, vector<1x96xf32>
    %c0_1 = arith.constant 0 : index
    %c96 = arith.constant 96 : index
    %1 = vector.load %arg3[%c0_1, %c96] : memref<8x128xf32, #tpu.memory_space<vmem>>, vector<1x32xf32>
    %c1 = arith.constant 1 : index
    %c0_2 = arith.constant 0 : index
    %2 = vector.load %arg3[%c1, %c0_2] : memref<8x128xf32, #tpu.memory_space<vmem>>, vector<1x32xf32>
    %c1_3 = arith.constant 1 : index
    %c32 = arith.constant 32 : index
    %3 = vector.load %arg3[%c1_3, %c32] : memref<8x128xf32, #tpu.memory_space<vmem>>, vector<1x32xf32>
    %c1_4 = arith.constant 1 : index
    %c64 = arith.constant 64 : index
    %4 = vector.load %arg3[%c1_4, %c64] : memref<8x128xf32, #tpu.memory_space<vmem>>, vector<1x8xf32>
    %c1_5 = arith.constant 1 : index
    %c72 = arith.constant 72 : index
    %5 = vector.load %arg3[%c1_5, %c72] : memref<8x128xf32, #tpu.memory_space<vmem>>, vector<1x1xf32>
    %c2 = arith.constant 2 : index
    %c0_6 = arith.constant 0 : index
    %6 = vector.load %arg3[%c2, %c0_6] : memref<8x128xf32, #tpu.memory_space<vmem>>, vector<5x8xf32>
    %c7 = arith.constant 7 : index
    %c0_7 = arith.constant 0 : index
    %7 = vector.load %arg3[%c7, %c0_7] : memref<8x128xf32, #tpu.memory_space<vmem>>, vector<1x8xf32>
    %c0_8 = arith.constant 0 : index
    %c0_9 = arith.constant 0 : index
    %8 = vector.load %arg1[%c0_8, %c0_9] : memref<2x5xf32, #tpu.memory_space<vmem>>, vector<2x5xf32>
    %cst = arith.constant dense<0.000000e+00> : vector<2x8xf32>
    %9 = tpu.matmul %8, %6, %cst {dimension_numbers = #tpu.dot_dimension_numbers<[1], [0], [0], [1], [0, 0, 1, 1], [], []>} : vector<2x5xf32>, vector<5x8xf32>, vector<2x8xf32> -> vector<2x8xf32>
    %10 = vector.broadcast %4 : vector<1x8xf32> to vector<2x8xf32>
    %11 = arith.addf %9, %10 : vector<2x8xf32>
    %cst_10 = arith.constant 0.000000e+00 : f32
    %12 = vector.broadcast %cst_10 : f32 to vector<2x8xf32>
    %13 = arith.maximumf %11, %12 : vector<2x8xf32>
    %14 = vector.broadcast %7 : vector<1x8xf32> to vector<2x8xf32>
    %15 = arith.mulf %13, %14 : vector<2x8xf32>
    %cst_11 = arith.constant dense<0.000000e+00> : vector<2xf32>
    %16 = vector.multi_reduction <add>, %15, %cst_11 [1] : vector<2x8xf32> to vector<2xf32>
    %17 = vector.shape_cast %16 : vector<2xf32> to vector<2x1xf32>
    %18 = vector.broadcast %5 : vector<1x1xf32> to vector<2x1xf32>
    %19 = arith.addf %17, %18 : vector<2x1xf32>
    %20 = arith.negf %19 : vector<2x1xf32>
    %21 = math.exp %20 : vector<2x1xf32>
    %cst_12 = arith.constant 1.000000e+00 : f32
    %22 = vector.broadcast %cst_12 : f32 to vector<2x1xf32>
    %23 = arith.addf %22, %21 : vector<2x1xf32>
    %24 = arith.divf %22, %23 : vector<2x1xf32>
    %c0_13 = arith.constant 0 : index
    %c0_14 = arith.constant 0 : index
    %25 = vector.load %arg0[%c0_13, %c0_14] : memref<16x32xf32, #tpu.memory_space<vmem>>, vector<16x32xf32>
    %c0_15 = arith.constant 0 : index
    %c0_16 = arith.constant 0 : index
    %26 = vector.load %arg2[%c0_15, %c0_16] : memref<32x128xf32, #tpu.memory_space<vmem>>, vector<32x96xf32>
    %cst_17 = arith.constant dense<0.000000e+00> : vector<16x96xf32>
    %27 = tpu.matmul %25, %26, %cst_17 {dimension_numbers = #tpu.dot_dimension_numbers<[1], [0], [0], [1], [0, 0, 1, 1], [], []>} : vector<16x32xf32>, vector<32x96xf32>, vector<16x96xf32> -> vector<16x96xf32>
    %28 = vector.broadcast %0 : vector<1x96xf32> to vector<16x96xf32>
    %29 = arith.addf %27, %28 : vector<16x96xf32>
    %c0_18 = arith.constant 0 : index
    %c0_19 = arith.constant 0 : index
    %30 = vector.load %arg5[%c0_18, %c0_19] : memref<16x96xf32, #tpu.memory_space<vmem>>, vector<16x96xf32>
    tpu.vector_store %arg5[%c0_18, %c0_19], %29 {strides = array<i32>} : memref<16x96xf32, #tpu.memory_space<vmem>>, vector<16x96xf32>,
    %c0_20 = arith.constant 0 : index
    %c0_21 = arith.constant 0 : index
    %31 = vector.load %arg5[%c0_20, %c0_21] : memref<16x96xf32, #tpu.memory_space<vmem>>, vector<8x8xf32>
    %c0_22 = arith.constant 0 : index
    %c32_23 = arith.constant 32 : index
    %32 = vector.load %arg5[%c0_22, %c32_23] : memref<16x96xf32, #tpu.memory_space<vmem>>, vector<8x8xf32>
    %c0_24 = arith.constant 0 : index
    %c64_25 = arith.constant 64 : index
    %33 = vector.load %arg5[%c0_24, %c64_25] : memref<16x96xf32, #tpu.memory_space<vmem>>, vector<8x8xf32>
    %cst_26 = arith.constant dense<0.000000e+00> : vector<8x8xf32>
    %34 = tpu.matmul %31, %32, %cst_26 {dimension_numbers = #tpu.dot_dimension_numbers<[1], [1], [0], [0], [0, 0, 1, 0], [], []>} : vector<8x8xf32>, vector<8x8xf32>, vector<8x8xf32> -> vector<8x8xf32>
    %cst_27 = arith.constant dense<0xFF800000> : vector<8xf32>
    %35 = vector.multi_reduction <maximumf>, %34, %cst_27 [1] : vector<8x8xf32> to vector<8xf32>
    %36 = vector.shape_cast %35 : vector<8xf32> to vector<8x1xf32>
    %37 = vector.broadcast %36 : vector<8x1xf32> to vector<8x8xf32>
    %38 = arith.subf %34, %37 : vector<8x8xf32>
    %39 = math.exp %38 : vector<8x8xf32>
    %cst_28 = arith.constant dense<0.000000e+00> : vector<8xf32>
    %40 = vector.multi_reduction <add>, %39, %cst_28 [1] : vector<8x8xf32> to vector<8xf32>
    %41 = vector.shape_cast %40 : vector<8xf32> to vector<8x1xf32>
    %42 = tpu.reciprocal %41 {approx = true} : vector<8x1xf32> -> vector<8x1xf32>
    %43 = arith.mulf %41, %42 : vector<8x1xf32>
    %cst_29 = arith.constant 2.000000e+00 : f32
    %44 = vector.broadcast %cst_29 : f32 to vector<8x1xf32>
    %45 = arith.subf %44, %43 : vector<8x1xf32>
    %46 = arith.mulf %42, %45 : vector<8x1xf32>
    %47 = vector.broadcast %46 : vector<8x1xf32> to vector<8x8xf32>
    %48 = arith.mulf %39, %47 : vector<8x8xf32>
    %cst_30 = arith.constant dense<0.000000e+00> : vector<8x8xf32>
    %49 = tpu.matmul %48, %33, %cst_30 {dimension_numbers = #tpu.dot_dimension_numbers<[1], [0], [0], [1], [0, 0, 1, 1], [], []>} : vector<8x8xf32>, vector<8x8xf32>, vector<8x8xf32> -> vector<8x8xf32>
    %c0_31 = arith.constant 0 : index
    %c96_32 = arith.constant 96 : index
    %50 = vector.load %arg2[%c0_31, %c96_32] : memref<32x128xf32, #tpu.memory_space<vmem>>, vector<8x32xf32>
    %cst_33 = arith.constant dense<0.000000e+00> : vector<8x32xf32>
    %51 = tpu.matmul %49, %50, %cst_33 {dimension_numbers = #tpu.dot_dimension_numbers<[1], [0], [0], [1], [0, 0, 1, 1], [], []>} : vector<8x8xf32>, vector<8x32xf32>, vector<8x32xf32> -> vector<8x32xf32>
    %c0_34 = arith.constant 0 : index
    %c8 = arith.constant 8 : index
    %52 = vector.load %arg5[%c0_34, %c8] : memref<16x96xf32, #tpu.memory_space<vmem>>, vector<8x8xf32>
    %c0_35 = arith.constant 0 : index
    %c40 = arith.constant 40 : index
    %53 = vector.load %arg5[%c0_35, %c40] : memref<16x96xf32, #tpu.memory_space<vmem>>, vector<8x8xf32>
    %c0_36 = arith.constant 0 : index
    %c72_37 = arith.constant 72 : index
    %54 = vector.load %arg5[%c0_36, %c72_37] : memref<16x96xf32, #tpu.memory_space<vmem>>, vector<8x8xf32>
    %cst_38 = arith.constant dense<0.000000e+00> : vector<8x8xf32>
    %55 = tpu.matmul %52, %53, %cst_38 {dimension_numbers = #tpu.dot_dimension_numbers<[1], [1], [0], [0], [0, 0, 1, 0], [], []>} : vector<8x8xf32>, vector<8x8xf32>, vector<8x8xf32> -> vector<8x8xf32>
    %cst_39 = arith.constant dense<0xFF800000> : vector<8xf32>
    %56 = vector.multi_reduction <maximumf>, %55, %cst_39 [1] : vector<8x8xf32> to vector<8xf32>
    %57 = vector.shape_cast %56 : vector<8xf32> to vector<8x1xf32>
    %58 = vector.broadcast %57 : vector<8x1xf32> to vector<8x8xf32>
    %59 = arith.subf %55, %58 : vector<8x8xf32>
    %60 = math.exp %59 : vector<8x8xf32>
    %cst_40 = arith.constant dense<0.000000e+00> : vector<8xf32>
    %61 = vector.multi_reduction <add>, %60, %cst_40 [1] : vector<8x8xf32> to vector<8xf32>
    %62 = vector.shape_cast %61 : vector<8xf32> to vector<8x1xf32>
    %63 = tpu.reciprocal %62 {approx = true} : vector<8x1xf32> -> vector<8x1xf32>
    %64 = arith.mulf %62, %63 : vector<8x1xf32>
    %cst_41 = arith.constant 2.000000e+00 : f32
    %65 = vector.broadcast %cst_41 : f32 to vector<8x1xf32>
    %66 = arith.subf %65, %64 : vector<8x1xf32>
    %67 = arith.mulf %63, %66 : vector<8x1xf32>
    %68 = vector.broadcast %67 : vector<8x1xf32> to vector<8x8xf32>
    %69 = arith.mulf %60, %68 : vector<8x8xf32>
    %cst_42 = arith.constant dense<0.000000e+00> : vector<8x8xf32>
    %70 = tpu.matmul %69, %54, %cst_42 {dimension_numbers = #tpu.dot_dimension_numbers<[1], [0], [0], [1], [0, 0, 1, 1], [], []>} : vector<8x8xf32>, vector<8x8xf32>, vector<8x8xf32> -> vector<8x8xf32>
    %c8_43 = arith.constant 8 : index
    %c96_44 = arith.constant 96 : index
    %71 = vector.load %arg2[%c8_43, %c96_44] : memref<32x128xf32, #tpu.memory_space<vmem>>, vector<8x32xf32>
    %cst_45 = arith.constant dense<0.000000e+00> : vector<8x32xf32>
    %72 = tpu.matmul %70, %71, %cst_45 {dimension_numbers = #tpu.dot_dimension_numbers<[1], [0], [0], [1], [0, 0, 1, 1], [], []>} : vector<8x8xf32>, vector<8x32xf32>, vector<8x32xf32> -> vector<8x32xf32>
    %73 = arith.addf %51, %72 : vector<8x32xf32>
    %c0_46 = arith.constant 0 : index
    %c16 = arith.constant 16 : index
    %74 = vector.load %arg5[%c0_46, %c16] : memref<16x96xf32, #tpu.memory_space<vmem>>, vector<8x8xf32>
    %c0_47 = arith.constant 0 : index
    %c48 = arith.constant 48 : index
    %75 = vector.load %arg5[%c0_47, %c48] : memref<16x96xf32, #tpu.memory_space<vmem>>, vector<8x8xf32>
    %c0_48 = arith.constant 0 : index
    %c80 = arith.constant 80 : index
    %76 = vector.load %arg5[%c0_48, %c80] : memref<16x96xf32, #tpu.memory_space<vmem>>, vector<8x8xf32>
    %cst_49 = arith.constant dense<0.000000e+00> : vector<8x8xf32>
    %77 = tpu.matmul %74, %75, %cst_49 {dimension_numbers = #tpu.dot_dimension_numbers<[1], [1], [0], [0], [0, 0, 1, 0], [], []>} : vector<8x8xf32>, vector<8x8xf32>, vector<8x8xf32> -> vector<8x8xf32>
    %cst_50 = arith.constant dense<0xFF800000> : vector<8xf32>
    %78 = vector.multi_reduction <maximumf>, %77, %cst_50 [1] : vector<8x8xf32> to vector<8xf32>
    %79 = vector.shape_cast %78 : vector<8xf32> to vector<8x1xf32>
    %80 = vector.broadcast %79 : vector<8x1xf32> to vector<8x8xf32>
    %81 = arith.subf %77, %80 : vector<8x8xf32>
    %82 = math.exp %81 : vector<8x8xf32>
    %cst_51 = arith.constant dense<0.000000e+00> : vector<8xf32>
    %83 = vector.multi_reduction <add>, %82, %cst_51 [1] : vector<8x8xf32> to vector<8xf32>
    %84 = vector.shape_cast %83 : vector<8xf32> to vector<8x1xf32>
    %85 = tpu.reciprocal %84 {approx = true} : vector<8x1xf32> -> vector<8x1xf32>
    %86 = arith.mulf %84, %85 : vector<8x1xf32>
    %cst_52 = arith.constant 2.000000e+00 : f32
    %87 = vector.broadcast %cst_52 : f32 to vector<8x1xf32>
    %88 = arith.subf %87, %86 : vector<8x1xf32>
    %89 = arith.mulf %85, %88 : vector<8x1xf32>
    %90 = vector.broadcast %89 : vector<8x1xf32> to vector<8x8xf32>
    %91 = arith.mulf %82, %90 : vector<8x8xf32>
    %cst_53 = arith.constant dense<0.000000e+00> : vector<8x8xf32>
    %92 = tpu.matmul %91, %76, %cst_53 {dimension_numbers = #tpu.dot_dimension_numbers<[1], [0], [0], [1], [0, 0, 1, 1], [], []>} : vector<8x8xf32>, vector<8x8xf32>, vector<8x8xf32> -> vector<8x8xf32>
    %c16_54 = arith.constant 16 : index
    %c96_55 = arith.constant 96 : index
    %93 = vector.load %arg2[%c16_54, %c96_55] : memref<32x128xf32, #tpu.memory_space<vmem>>, vector<8x32xf32>
    %cst_56 = arith.constant dense<0.000000e+00> : vector<8x32xf32>
    %94 = tpu.matmul %92, %93, %cst_56 {dimension_numbers = #tpu.dot_dimension_numbers<[1], [0], [0], [1], [0, 0, 1, 1], [], []>} : vector<8x8xf32>, vector<8x32xf32>, vector<8x32xf32> -> vector<8x32xf32>
    %95 = arith.addf %73, %94 : vector<8x32xf32>
    %c0_57 = arith.constant 0 : index
    %c24 = arith.constant 24 : index
    %96 = vector.load %arg5[%c0_57, %c24] : memref<16x96xf32, #tpu.memory_space<vmem>>, vector<8x8xf32>
    %c0_58 = arith.constant 0 : index
    %c56 = arith.constant 56 : index
    %97 = vector.load %arg5[%c0_58, %c56] : memref<16x96xf32, #tpu.memory_space<vmem>>, vector<8x8xf32>
    %c0_59 = arith.constant 0 : index
    %c88 = arith.constant 88 : index
    %98 = vector.load %arg5[%c0_59, %c88] : memref<16x96xf32, #tpu.memory_space<vmem>>, vector<8x8xf32>
    %cst_60 = arith.constant dense<0.000000e+00> : vector<8x8xf32>
    %99 = tpu.matmul %96, %97, %cst_60 {dimension_numbers = #tpu.dot_dimension_numbers<[1], [1], [0], [0], [0, 0, 1, 0], [], []>} : vector<8x8xf32>, vector<8x8xf32>, vector<8x8xf32> -> vector<8x8xf32>
    %cst_61 = arith.constant dense<0xFF800000> : vector<8xf32>
    %100 = vector.multi_reduction <maximumf>, %99, %cst_61 [1] : vector<8x8xf32> to vector<8xf32>
    %101 = vector.shape_cast %100 : vector<8xf32> to vector<8x1xf32>
    %102 = vector.broadcast %101 : vector<8x1xf32> to vector<8x8xf32>
    %103 = arith.subf %99, %102 : vector<8x8xf32>
    %104 = math.exp %103 : vector<8x8xf32>
    %cst_62 = arith.constant dense<0.000000e+00> : vector<8xf32>
    %105 = vector.multi_reduction <add>, %104, %cst_62 [1] : vector<8x8xf32> to vector<8xf32>
    %106 = vector.shape_cast %105 : vector<8xf32> to vector<8x1xf32>
    %107 = tpu.reciprocal %106 {approx = true} : vector<8x1xf32> -> vector<8x1xf32>
    %108 = arith.mulf %106, %107 : vector<8x1xf32>
    %cst_63 = arith.constant 2.000000e+00 : f32
    %109 = vector.broadcast %cst_63 : f32 to vector<8x1xf32>
    %110 = arith.subf %109, %108 : vector<8x1xf32>
    %111 = arith.mulf %107, %110 : vector<8x1xf32>
    %112 = vector.broadcast %111 : vector<8x1xf32> to vector<8x8xf32>
    %113 = arith.mulf %104, %112 : vector<8x8xf32>
    %cst_64 = arith.constant dense<0.000000e+00> : vector<8x8xf32>
    %114 = tpu.matmul %113, %98, %cst_64 {dimension_numbers = #tpu.dot_dimension_numbers<[1], [0], [0], [1], [0, 0, 1, 1], [], []>} : vector<8x8xf32>, vector<8x8xf32>, vector<8x8xf32> -> vector<8x8xf32>
    %c24_65 = arith.constant 24 : index
    %c96_66 = arith.constant 96 : index
    %115 = vector.load %arg2[%c24_65, %c96_66] : memref<32x128xf32, #tpu.memory_space<vmem>>, vector<8x32xf32>
    %cst_67 = arith.constant dense<0.000000e+00> : vector<8x32xf32>
    %116 = tpu.matmul %114, %115, %cst_67 {dimension_numbers = #tpu.dot_dimension_numbers<[1], [0], [0], [1], [0, 0, 1, 1], [], []>} : vector<8x8xf32>, vector<8x32xf32>, vector<8x32xf32> -> vector<8x32xf32>
    %117 = arith.addf %95, %116 : vector<8x32xf32>
    %118 = vector.broadcast %1 : vector<1x32xf32> to vector<8x32xf32>
    %119 = arith.addf %117, %118 : vector<8x32xf32>
    %120 = vector.extract_strided_slice %24 {offsets = [0, 0], sizes = [1, 1], strides = [1, 1]} : vector<2x1xf32> to vector<1x1xf32>
    %121 = vector.broadcast %120 : vector<1x1xf32> to vector<8x32xf32>
    %122 = arith.mulf %119, %121 : vector<8x32xf32>
    %c0_68 = arith.constant 0 : index
    %c0_69 = arith.constant 0 : index
    %123 = vector.load %arg0[%c0_68, %c0_69] : memref<16x32xf32, #tpu.memory_space<vmem>>, vector<8x32xf32>
    %124 = arith.addf %123, %122 : vector<8x32xf32>
    %cst_70 = arith.constant dense<0.000000e+00> : vector<8xf32>
    %125 = vector.multi_reduction <add>, %124, %cst_70 [1] : vector<8x32xf32> to vector<8xf32>
    %126 = vector.shape_cast %125 : vector<8xf32> to vector<8x1xf32>
    %cst_71 = arith.constant 3.200000e+01 : f32
    %127 = vector.broadcast %cst_71 : f32 to vector<8x1xf32>
    %128 = arith.divf %126, %127 : vector<8x1xf32>
    %129 = vector.broadcast %128 : vector<8x1xf32> to vector<8x32xf32>
    %130 = arith.subf %124, %129 : vector<8x32xf32>
    %131 = vector.broadcast %128 : vector<8x1xf32> to vector<8x32xf32>
    %132 = arith.subf %124, %131 : vector<8x32xf32>
    %133 = arith.mulf %130, %132 : vector<8x32xf32>
    %cst_72 = arith.constant dense<0.000000e+00> : vector<8xf32>
    %134 = vector.multi_reduction <add>, %133, %cst_72 [1] : vector<8x32xf32> to vector<8xf32>
    %135 = vector.shape_cast %134 : vector<8xf32> to vector<8x1xf32>
    %cst_73 = arith.constant 3.200000e+01 : f32
    %136 = vector.broadcast %cst_73 : f32 to vector<8x1xf32>
    %137 = arith.divf %135, %136 : vector<8x1xf32>
    %138 = vector.broadcast %128 : vector<8x1xf32> to vector<8x32xf32>
    %139 = arith.subf %124, %138 : vector<8x32xf32>
    %cst_74 = arith.constant 9.99999974E-6 : f32
    %140 = vector.broadcast %cst_74 : f32 to vector<8x1xf32>
    %141 = arith.addf %137, %140 : vector<8x1xf32>
    %142 = math.rsqrt %141 : vector<8x1xf32>
    %143 = vector.broadcast %142 : vector<8x1xf32> to vector<8x32xf32>
    %144 = arith.mulf %139, %143 : vector<8x32xf32>
    %145 = vector.broadcast %2 : vector<1x32xf32> to vector<8x32xf32>
    %146 = arith.mulf %144, %145 : vector<8x32xf32>
    %147 = vector.broadcast %3 : vector<1x32xf32> to vector<8x32xf32>
    %148 = arith.addf %146, %147 : vector<8x32xf32>
    %c0_75 = arith.constant 0 : index
    %c0_76 = arith.constant 0 : index
    %149 = vector.load %arg4[%c0_75, %c0_76] : memref<16x32xf32, #tpu.memory_space<vmem>>, vector<8x32xf32>
    tpu.vector_store %arg4[%c0_75, %c0_76], %148 {strides = array<i32>} : memref<16x32xf32, #tpu.memory_space<vmem>>, vector<8x32xf32>,
    %c8_77 = arith.constant 8 : index
    %c0_78 = arith.constant 0 : index
    %150 = vector.load %arg5[%c8_77, %c0_78] : memref<16x96xf32, #tpu.memory_space<vmem>>, vector<8x8xf32>
    %c8_79 = arith.constant 8 : index
    %c32_80 = arith.constant 32 : index
    %151 = vector.load %arg5[%c8_79, %c32_80] : memref<16x96xf32, #tpu.memory_space<vmem>>, vector<8x8xf32>
    %c8_81 = arith.constant 8 : index
    %c64_82 = arith.constant 64 : index
    %152 = vector.load %arg5[%c8_81, %c64_82] : memref<16x96xf32, #tpu.memory_space<vmem>>, vector<8x8xf32>
    %cst_83 = arith.constant dense<0.000000e+00> : vector<8x8xf32>
    %153 = tpu.matmul %150, %151, %cst_83 {dimension_numbers = #tpu.dot_dimension_numbers<[1], [1], [0], [0], [0, 0, 1, 0], [], []>} : vector<8x8xf32>, vector<8x8xf32>, vector<8x8xf32> -> vector<8x8xf32>
    %cst_84 = arith.constant dense<0xFF800000> : vector<8xf32>
    %154 = vector.multi_reduction <maximumf>, %153, %cst_84 [1] : vector<8x8xf32> to vector<8xf32>
    %155 = vector.shape_cast %154 : vector<8xf32> to vector<8x1xf32>
    %156 = vector.broadcast %155 : vector<8x1xf32> to vector<8x8xf32>
    %157 = arith.subf %153, %156 : vector<8x8xf32>
    %158 = math.exp %157 : vector<8x8xf32>
    %cst_85 = arith.constant dense<0.000000e+00> : vector<8xf32>
    %159 = vector.multi_reduction <add>, %158, %cst_85 [1] : vector<8x8xf32> to vector<8xf32>
    %160 = vector.shape_cast %159 : vector<8xf32> to vector<8x1xf32>
    %161 = tpu.reciprocal %160 {approx = true} : vector<8x1xf32> -> vector<8x1xf32>
    %162 = arith.mulf %160, %161 : vector<8x1xf32>
    %cst_86 = arith.constant 2.000000e+00 : f32
    %163 = vector.broadcast %cst_86 : f32 to vector<8x1xf32>
    %164 = arith.subf %163, %162 : vector<8x1xf32>
    %165 = arith.mulf %161, %164 : vector<8x1xf32>
    %166 = vector.broadcast %165 : vector<8x1xf32> to vector<8x8xf32>
    %167 = arith.mulf %158, %166 : vector<8x8xf32>
    %cst_87 = arith.constant dense<0.000000e+00> : vector<8x8xf32>
    %168 = tpu.matmul %167, %152, %cst_87 {dimension_numbers = #tpu.dot_dimension_numbers<[1], [0], [0], [1], [0, 0, 1, 1], [], []>} : vector<8x8xf32>, vector<8x8xf32>, vector<8x8xf32> -> vector<8x8xf32>
    %c0_88 = arith.constant 0 : index
    %c96_89 = arith.constant 96 : index
    %169 = vector.load %arg2[%c0_88, %c96_89] : memref<32x128xf32, #tpu.memory_space<vmem>>, vector<8x32xf32>
    %cst_90 = arith.constant dense<0.000000e+00> : vector<8x32xf32>
    %170 = tpu.matmul %168, %169, %cst_90 {dimension_numbers = #tpu.dot_dimension_numbers<[1], [0], [0], [1], [0, 0, 1, 1], [], []>} : vector<8x8xf32>, vector<8x32xf32>, vector<8x32xf32> -> vector<8x32xf32>
    %c8_91 = arith.constant 8 : index
    %c8_92 = arith.constant 8 : index
    %171 = vector.load %arg5[%c8_91, %c8_92] : memref<16x96xf32, #tpu.memory_space<vmem>>, vector<8x8xf32>
    %c8_93 = arith.constant 8 : index
    %c40_94 = arith.constant 40 : index
    %172 = vector.load %arg5[%c8_93, %c40_94] : memref<16x96xf32, #tpu.memory_space<vmem>>, vector<8x8xf32>
    %c8_95 = arith.constant 8 : index
    %c72_96 = arith.constant 72 : index
    %173 = vector.load %arg5[%c8_95, %c72_96] : memref<16x96xf32, #tpu.memory_space<vmem>>, vector<8x8xf32>
    %cst_97 = arith.constant dense<0.000000e+00> : vector<8x8xf32>
    %174 = tpu.matmul %171, %172, %cst_97 {dimension_numbers = #tpu.dot_dimension_numbers<[1], [1], [0], [0], [0, 0, 1, 0], [], []>} : vector<8x8xf32>, vector<8x8xf32>, vector<8x8xf32> -> vector<8x8xf32>
    %cst_98 = arith.constant dense<0xFF800000> : vector<8xf32>
    %175 = vector.multi_reduction <maximumf>, %174, %cst_98 [1] : vector<8x8xf32> to vector<8xf32>
    %176 = vector.shape_cast %175 : vector<8xf32> to vector<8x1xf32>
    %177 = vector.broadcast %176 : vector<8x1xf32> to vector<8x8xf32>
    %178 = arith.subf %174, %177 : vector<8x8xf32>
    %179 = math.exp %178 : vector<8x8xf32>
    %cst_99 = arith.constant dense<0.000000e+00> : vector<8xf32>
    %180 = vector.multi_reduction <add>, %179, %cst_99 [1] : vector<8x8xf32> to vector<8xf32>
    %181 = vector.shape_cast %180 : vector<8xf32> to vector<8x1xf32>
    %182 = tpu.reciprocal %181 {approx = true} : vector<8x1xf32> -> vector<8x1xf32>
    %183 = arith.mulf %181, %182 : vector<8x1xf32>
    %cst_100 = arith.constant 2.000000e+00 : f32
    %184 = vector.broadcast %cst_100 : f32 to vector<8x1xf32>
    %185 = arith.subf %184, %183 : vector<8x1xf32>
    %186 = arith.mulf %182, %185 : vector<8x1xf32>
    %187 = vector.broadcast %186 : vector<8x1xf32> to vector<8x8xf32>
    %188 = arith.mulf %179, %187 : vector<8x8xf32>
    %cst_101 = arith.constant dense<0.000000e+00> : vector<8x8xf32>
    %189 = tpu.matmul %188, %173, %cst_101 {dimension_numbers = #tpu.dot_dimension_numbers<[1], [0], [0], [1], [0, 0, 1, 1], [], []>} : vector<8x8xf32>, vector<8x8xf32>, vector<8x8xf32> -> vector<8x8xf32>
    %c8_102 = arith.constant 8 : index
    %c96_103 = arith.constant 96 : index
    %190 = vector.load %arg2[%c8_102, %c96_103] : memref<32x128xf32, #tpu.memory_space<vmem>>, vector<8x32xf32>
    %cst_104 = arith.constant dense<0.000000e+00> : vector<8x32xf32>
    %191 = tpu.matmul %189, %190, %cst_104 {dimension_numbers = #tpu.dot_dimension_numbers<[1], [0], [0], [1], [0, 0, 1, 1], [], []>} : vector<8x8xf32>, vector<8x32xf32>, vector<8x32xf32> -> vector<8x32xf32>
    %192 = arith.addf %170, %191 : vector<8x32xf32>
    %c8_105 = arith.constant 8 : index
    %c16_106 = arith.constant 16 : index
    %193 = vector.load %arg5[%c8_105, %c16_106] : memref<16x96xf32, #tpu.memory_space<vmem>>, vector<8x8xf32>
    %c8_107 = arith.constant 8 : index
    %c48_108 = arith.constant 48 : index
    %194 = vector.load %arg5[%c8_107, %c48_108] : memref<16x96xf32, #tpu.memory_space<vmem>>, vector<8x8xf32>
    %c8_109 = arith.constant 8 : index
    %c80_110 = arith.constant 80 : index
    %195 = vector.load %arg5[%c8_109, %c80_110] : memref<16x96xf32, #tpu.memory_space<vmem>>, vector<8x8xf32>
    %cst_111 = arith.constant dense<0.000000e+00> : vector<8x8xf32>
    %196 = tpu.matmul %193, %194, %cst_111 {dimension_numbers = #tpu.dot_dimension_numbers<[1], [1], [0], [0], [0, 0, 1, 0], [], []>} : vector<8x8xf32>, vector<8x8xf32>, vector<8x8xf32> -> vector<8x8xf32>
    %cst_112 = arith.constant dense<0xFF800000> : vector<8xf32>
    %197 = vector.multi_reduction <maximumf>, %196, %cst_112 [1] : vector<8x8xf32> to vector<8xf32>
    %198 = vector.shape_cast %197 : vector<8xf32> to vector<8x1xf32>
    %199 = vector.broadcast %198 : vector<8x1xf32> to vector<8x8xf32>
    %200 = arith.subf %196, %199 : vector<8x8xf32>
    %201 = math.exp %200 : vector<8x8xf32>
    %cst_113 = arith.constant dense<0.000000e+00> : vector<8xf32>
    %202 = vector.multi_reduction <add>, %201, %cst_113 [1] : vector<8x8xf32> to vector<8xf32>
    %203 = vector.shape_cast %202 : vector<8xf32> to vector<8x1xf32>
    %204 = tpu.reciprocal %203 {approx = true} : vector<8x1xf32> -> vector<8x1xf32>
    %205 = arith.mulf %203, %204 : vector<8x1xf32>
    %cst_114 = arith.constant 2.000000e+00 : f32
    %206 = vector.broadcast %cst_114 : f32 to vector<8x1xf32>
    %207 = arith.subf %206, %205 : vector<8x1xf32>
    %208 = arith.mulf %204, %207 : vector<8x1xf32>
    %209 = vector.broadcast %208 : vector<8x1xf32> to vector<8x8xf32>
    %210 = arith.mulf %201, %209 : vector<8x8xf32>
    %cst_115 = arith.constant dense<0.000000e+00> : vector<8x8xf32>
    %211 = tpu.matmul %210, %195, %cst_115 {dimension_numbers = #tpu.dot_dimension_numbers<[1], [0], [0], [1], [0, 0, 1, 1], [], []>} : vector<8x8xf32>, vector<8x8xf32>, vector<8x8xf32> -> vector<8x8xf32>
    %c16_116 = arith.constant 16 : index
    %c96_117 = arith.constant 96 : index
    %212 = vector.load %arg2[%c16_116, %c96_117] : memref<32x128xf32, #tpu.memory_space<vmem>>, vector<8x32xf32>
    %cst_118 = arith.constant dense<0.000000e+00> : vector<8x32xf32>
    %213 = tpu.matmul %211, %212, %cst_118 {dimension_numbers = #tpu.dot_dimension_numbers<[1], [0], [0], [1], [0, 0, 1, 1], [], []>} : vector<8x8xf32>, vector<8x32xf32>, vector<8x32xf32> -> vector<8x32xf32>
    %214 = arith.addf %192, %213 : vector<8x32xf32>
    %c8_119 = arith.constant 8 : index
    %c24_120 = arith.constant 24 : index
    %215 = vector.load %arg5[%c8_119, %c24_120] : memref<16x96xf32, #tpu.memory_space<vmem>>, vector<8x8xf32>
    %c8_121 = arith.constant 8 : index
    %c56_122 = arith.constant 56 : index
    %216 = vector.load %arg5[%c8_121, %c56_122] : memref<16x96xf32, #tpu.memory_space<vmem>>, vector<8x8xf32>
    %c8_123 = arith.constant 8 : index
    %c88_124 = arith.constant 88 : index
    %217 = vector.load %arg5[%c8_123, %c88_124] : memref<16x96xf32, #tpu.memory_space<vmem>>, vector<8x8xf32>
    %cst_125 = arith.constant dense<0.000000e+00> : vector<8x8xf32>
    %218 = tpu.matmul %215, %216, %cst_125 {dimension_numbers = #tpu.dot_dimension_numbers<[1], [1], [0], [0], [0, 0, 1, 0], [], []>} : vector<8x8xf32>, vector<8x8xf32>, vector<8x8xf32> -> vector<8x8xf32>
    %cst_126 = arith.constant dense<0xFF800000> : vector<8xf32>
    %219 = vector.multi_reduction <maximumf>, %218, %cst_126 [1] : vector<8x8xf32> to vector<8xf32>
    %220 = vector.shape_cast %219 : vector<8xf32> to vector<8x1xf32>
    %221 = vector.broadcast %220 : vector<8x1xf32> to vector<8x8xf32>
    %222 = arith.subf %218, %221 : vector<8x8xf32>
    %223 = math.exp %222 : vector<8x8xf32>
    %cst_127 = arith.constant dense<0.000000e+00> : vector<8xf32>
    %224 = vector.multi_reduction <add>, %223, %cst_127 [1] : vector<8x8xf32> to vector<8xf32>
    %225 = vector.shape_cast %224 : vector<8xf32> to vector<8x1xf32>
    %226 = tpu.reciprocal %225 {approx = true} : vector<8x1xf32> -> vector<8x1xf32>
    %227 = arith.mulf %225, %226 : vector<8x1xf32>
    %cst_128 = arith.constant 2.000000e+00 : f32
    %228 = vector.broadcast %cst_128 : f32 to vector<8x1xf32>
    %229 = arith.subf %228, %227 : vector<8x1xf32>
    %230 = arith.mulf %226, %229 : vector<8x1xf32>
    %231 = vector.broadcast %230 : vector<8x1xf32> to vector<8x8xf32>
    %232 = arith.mulf %223, %231 : vector<8x8xf32>
    %cst_129 = arith.constant dense<0.000000e+00> : vector<8x8xf32>
    %233 = tpu.matmul %232, %217, %cst_129 {dimension_numbers = #tpu.dot_dimension_numbers<[1], [0], [0], [1], [0, 0, 1, 1], [], []>} : vector<8x8xf32>, vector<8x8xf32>, vector<8x8xf32> -> vector<8x8xf32>
    %c24_130 = arith.constant 24 : index
    %c96_131 = arith.constant 96 : index
    %234 = vector.load %arg2[%c24_130, %c96_131] : memref<32x128xf32, #tpu.memory_space<vmem>>, vector<8x32xf32>
    %cst_132 = arith.constant dense<0.000000e+00> : vector<8x32xf32>
    %235 = tpu.matmul %233, %234, %cst_132 {dimension_numbers = #tpu.dot_dimension_numbers<[1], [0], [0], [1], [0, 0, 1, 1], [], []>} : vector<8x8xf32>, vector<8x32xf32>, vector<8x32xf32> -> vector<8x32xf32>
    %236 = arith.addf %214, %235 : vector<8x32xf32>
    %237 = vector.broadcast %1 : vector<1x32xf32> to vector<8x32xf32>
    %238 = arith.addf %236, %237 : vector<8x32xf32>
    %239 = vector.extract_strided_slice %24 {offsets = [1, 0], sizes = [1, 1], strides = [1, 1]} : vector<2x1xf32> to vector<1x1xf32>
    %240 = vector.broadcast %239 : vector<1x1xf32> to vector<8x32xf32>
    %241 = arith.mulf %238, %240 : vector<8x32xf32>
    %c8_133 = arith.constant 8 : index
    %c0_134 = arith.constant 0 : index
    %242 = vector.load %arg0[%c8_133, %c0_134] : memref<16x32xf32, #tpu.memory_space<vmem>>, vector<8x32xf32>
    %243 = arith.addf %242, %241 : vector<8x32xf32>
    %cst_135 = arith.constant dense<0.000000e+00> : vector<8xf32>
    %244 = vector.multi_reduction <add>, %243, %cst_135 [1] : vector<8x32xf32> to vector<8xf32>
    %245 = vector.shape_cast %244 : vector<8xf32> to vector<8x1xf32>
    %cst_136 = arith.constant 3.200000e+01 : f32
    %246 = vector.broadcast %cst_136 : f32 to vector<8x1xf32>
    %247 = arith.divf %245, %246 : vector<8x1xf32>
    %248 = vector.broadcast %247 : vector<8x1xf32> to vector<8x32xf32>
    %249 = arith.subf %243, %248 : vector<8x32xf32>
    %250 = vector.broadcast %247 : vector<8x1xf32> to vector<8x32xf32>
    %251 = arith.subf %243, %250 : vector<8x32xf32>
    %252 = arith.mulf %249, %251 : vector<8x32xf32>
    %cst_137 = arith.constant dense<0.000000e+00> : vector<8xf32>
    %253 = vector.multi_reduction <add>, %252, %cst_137 [1] : vector<8x32xf32> to vector<8xf32>
    %254 = vector.shape_cast %253 : vector<8xf32> to vector<8x1xf32>
    %cst_138 = arith.constant 3.200000e+01 : f32
    %255 = vector.broadcast %cst_138 : f32 to vector<8x1xf32>
    %256 = arith.divf %254, %255 : vector<8x1xf32>
    %257 = vector.broadcast %247 : vector<8x1xf32> to vector<8x32xf32>
    %258 = arith.subf %243, %257 : vector<8x32xf32>
    %cst_139 = arith.constant 9.99999974E-6 : f32
    %259 = vector.broadcast %cst_139 : f32 to vector<8x1xf32>
    %260 = arith.addf %256, %259 : vector<8x1xf32>
    %261 = math.rsqrt %260 : vector<8x1xf32>
    %262 = vector.broadcast %261 : vector<8x1xf32> to vector<8x32xf32>
    %263 = arith.mulf %258, %262 : vector<8x32xf32>
    %264 = vector.broadcast %2 : vector<1x32xf32> to vector<8x32xf32>
    %265 = arith.mulf %263, %264 : vector<8x32xf32>
    %266 = vector.broadcast %3 : vector<1x32xf32> to vector<8x32xf32>
    %267 = arith.addf %265, %266 : vector<8x32xf32>
    %c8_140 = arith.constant 8 : index
    %c0_141 = arith.constant 0 : index
    %268 = vector.load %arg4[%c8_140, %c0_141] : memref<16x32xf32, #tpu.memory_space<vmem>>, vector<8x32xf32>
    tpu.vector_store %arg4[%c8_140, %c0_141], %267 {strides = array<i32>} : memref<16x32xf32, #tpu.memory_space<vmem>>, vector<8x32xf32>,
    return
  }
}

</mosaic_0001>

<llo_original>
// kernel: entropy_aware_attention.1
$region0: #{entropy_aware_attention.1}
  #allocation0 [shape = 'u32[]', space=smem, size = 0x4, offset = 0x4, fixed_abs, tag = 'smem constant byte address 0x4 - core index']
  #allocation1 [shape = 'u32[72,128]{1,0:T(1,128)}', space=vmem, size = 0x9000, scoped, tag = 'internal scratch']
  #allocation2 [shape = 'f32[16,96]{1,0:T(8,128)}', space=vmem, size = 0x2000, scoped, tag = 'scratch operand']
  %s0 = inlined_call_operand.hbm [shape: f32[16,32], index: 0, kind: input, shape index: {}]
  %s1 = inlined_call_operand.hbm [shape: f32[2,5], index: 1, kind: input, shape index: {}]
  %s2 = inlined_call_operand.hbm [shape: f32[32,128], index: 2, kind: input, shape index: {}]
  %s3 = inlined_call_operand.hbm [shape: f32[8,128], index: 3, kind: input, shape index: {}]
  %s4 = inlined_call_operand.hbm [shape: f32[16,32], index: 4, kind: output, shape index: {}]
  %s5 = sld [smem:[#allocation0]]
  $region42: #{entropy_aware_attention.1} parent=0
    _
  %s7 = ssub.s32 1, %s5
  %s8 = scalar_select 0, %s7, %s5
  $region1: #{entropy_aware_attention.1} parent=0
    #allocation3 [shape = 'u8[8192]{0}', space=vmem, size = 0x2000, scoped, tag = 'input window, operand 0, single buffered']
    #allocation4 [shape = 's32[1]{0}', space=sflag, size = 0x4, scoped, tag = 'scoped memory for entropy_aware_attention.1']
    #allocation5 [shape = 's32[1]{0}', space=sflag, size = 0x4, scoped, tag = 'scoped memory for entropy_aware_attention.1']
    #allocation6 [shape = 'u8[1024]{0}', space=vmem, size = 0x400, scoped, tag = 'input window, operand 1, single buffered']
    #allocation7 [shape = 's32[1]{0}', space=sflag, size = 0x4, scoped, tag = 'scoped memory for entropy_aware_attention.1']
    #allocation8 [shape = 'u8[16384]{0}', space=vmem, size = 0x4000, scoped, tag = 'input window, operand 2, single buffered']
    #allocation9 [shape = 'u8[4096]{0}', space=vmem, size = 0x1000, scoped, tag = 'input window, operand 3, single buffered']
    #allocation10 [shape = 's32[1]{0}', space=sflag, size = 0x4, scoped, tag = 'scoped memory for entropy_aware_attention.1']
    #allocation11 [shape = 'u8[8192]{0}', space=vmem, size = 0x2000, scoped, tag = 'output window, operand 0, single buffered']
    %9 = vsyncpa [#allocation4], 0
    %10 = vsyncpa [#allocation7], 0
    %11 = vsyncpa [#allocation10], 0
    %12 = vsyncpa [#allocation5], 0
    // Predicated region
    $region2: #{entropy_aware_attention.1} parent=1 // pred_check
      _
    $region3: #{entropy_aware_attention.1} parent=1 // pred_check_branch
      %14 = sbr.rel (0) target = $region5
    $region4: #{entropy_aware_attention.1} parent=1 // pred_region
      %16 = vsyncadd [#allocation4], 0
      %s17 = sshll.u32 %s0, 4
      %s18 = int_to_ptr.hbm [resolvable:$true] %s17
      %s19 = sshll.u32 [#allocation3], 4
      %s20 = int_to_ptr.vmem [resolvable:$true] %s19
      %25 = dma.hbm_to_vmem [thread:$0]  %s18, 256, %s20, [#allocation4], 128, 128, 8
    $region5: #{entropy_aware_attention.1} parent=1 // pred_fallthru
      _
    // Predicated region
    $region6: #{entropy_aware_attention.1} parent=1 // pred_check
      _
    $region7: #{entropy_aware_attention.1} parent=1 // pred_check_branch
      %27 = sbr.rel (0) target = $region9
    $region8: #{entropy_aware_attention.1} parent=1 // pred_region
      %29 = vsyncadd [#allocation7], 0
      %s31 = sshll.u32 %s1, 4
      %s32 = int_to_ptr.hbm [resolvable:$true] %s31
      %s33 = sshll.u32 [#allocation6], 4
      %s34 = int_to_ptr.vmem [resolvable:$true] %s33
      %36 = dma.hbm_to_vmem [thread:$0]  %s32, 32, %s34, [#allocation7]
    $region9: #{entropy_aware_attention.1} parent=1 // pred_fallthru
      _
    // Predicated region
    $region10: #{entropy_aware_attention.1} parent=1 // pred_check
      _
    $region11: #{entropy_aware_attention.1} parent=1 // pred_check_branch
      %38 = sbr.rel (0) target = $region13
    $region12: #{entropy_aware_attention.1} parent=1 // pred_region
      %40 = vsyncadd [#allocation7], 0
      %s41 = sshll.u32 %s2, 4
      %s42 = int_to_ptr.hbm [resolvable:$true] %s41
      %s43 = sshll.u32 [#allocation8], 4
      %s44 = int_to_ptr.vmem [resolvable:$true] %s43
      %49 = dma.hbm_to_vmem [thread:$0]  %s42, 512, %s44, [#allocation7], 128, 128, 8
    $region13: #{entropy_aware_attention.1} parent=1 // pred_fallthru
      _
    // Predicated region
    $region14: #{entropy_aware_attention.1} parent=1 // pred_check
      _
    $region15: #{entropy_aware_attention.1} parent=1 // pred_check_branch
      %51 = sbr.rel (0) target = $region17
    $region16: #{entropy_aware_attention.1} parent=1 // pred_region
      %53 = vsyncadd [#allocation10], 0
      %s55 = sshll.u32 %s3, 4
      %s56 = int_to_ptr.hbm [resolvable:$true] %s55
      %s57 = sshll.u32 [#allocation9], 4
      %s58 = int_to_ptr.vmem [resolvable:$true] %s57
      %60 = dma.hbm_to_vmem [thread:$0]  %s56, 128, %s58, [#allocation10]
    $region17: #{entropy_aware_attention.1} parent=1 // pred_fallthru
      _
    // Predicated region
    $region18: #{entropy_aware_attention.1} parent=1 // pred_check
      _
    $region19: #{entropy_aware_attention.1} parent=1 // pred_check_branch
      %62 = sbr.rel (0) target = $region21
    $region20: #{entropy_aware_attention.1} parent=1 // pred_region
      %64 = dma.done [#allocation4], 256
    $region21: #{entropy_aware_attention.1} parent=1 // pred_fallthru
      _
    // Predicated region
    $region22: #{entropy_aware_attention.1} parent=1 // pred_check
      _
    $region23: #{entropy_aware_attention.1} parent=1 // pred_check_branch
      %66 = sbr.rel (0) target = $region25
    $region24: #{entropy_aware_attention.1} parent=1 // pred_region
      %68 = dma.done [#allocation7], 32
    $region25: #{entropy_aware_attention.1} parent=1 // pred_fallthru
      _
    // Predicated region
    $region26: #{entropy_aware_attention.1} parent=1 // pred_check
      _
    $region27: #{entropy_aware_attention.1} parent=1 // pred_check_branch
      %70 = sbr.rel (0) target = $region29
    $region28: #{entropy_aware_attention.1} parent=1 // pred_region
      %72 = dma.done [#allocation7], 512
    $region29: #{entropy_aware_attention.1} parent=1 // pred_fallthru
      _
    // Predicated region
    $region30: #{entropy_aware_attention.1} parent=1 // pred_check
      _
    $region31: #{entropy_aware_attention.1} parent=1 // pred_check_branch
      %74 = sbr.rel (0) target = $region33
    $region32: #{entropy_aware_attention.1} parent=1 // pred_region
      %76 = dma.done [#allocation10], 128
    $region33: #{entropy_aware_attention.1} parent=1 // pred_fallthru
      _
    %v77 = vld [vmem:[#allocation9] sm:$0x1]
    %v78 = vld [vmem:[#allocation9 + $0x1] sm:$0x1]
    %v79 = vld [vmem:[#allocation9 + $0x2] sm:$0x1f]
    %v80 = vld [vmem:[#allocation9 + $0x7] sm:$0x1]
    %v81 = vld [vmem:[#allocation6] sm:$0x3]
    %v82 = vperm.slane %v78, 0
    %84 = vrot.lane.b32.xlu0 %v82, 64
    %v85 = vpop.permute.xlu0 %84
    %vm87 = vcmask 39936
    %v89 = vsel %vm87, %v81, 0
    %vm91 = vcmask 1044480
    %v93 = vsel %vm91, %v79, 0
    %95 = vmatpush.msra.mxu0 0.0
    %96 = vmatpush.msra.mxu0 0.0
    %97 = vmatpush.msra.mxu0 0.0
    %98 = vmatpush.msra.mxu0 0.0
    %99 = vmatpush.msra.mxu0 0.0
    %100 = vmatpush.msra.mxu0 0.0
    %101 = vmatpush.msra.mxu0 0.0
    %102 = vmatpush.msra.mxu0 0.0
    %103 = vmatpush.msra.mxu0 0.0
    %104 = vmatpush.msra.mxu0 0.0
    %105 = vmatpush.msra.mxu0 0.0
    %106 = vmatpush.msra.mxu0 0.0
    %107 = vmatpush.msra.mxu0 0.0
    %108 = vmatpush.msra.mxu0 0.0
    %109 = vmatpush.msra.mxu0 0.0
    %110 = vmatpush.msra.mxu0 %v93
    %111 = vmatmul.f32.gmra.mxu0 %v89
    %v112 = vpop.f32.mrf.mxu0
    %v113 = vadd.f32 %v85, %v112
    %114 = vdwg.mxu0
    %v115 = vmax.f32 %v113, 0.0
    %v116 = vperm.slane %v80, 0
    %v117 = vmul.f32 %v115, %v116
    %vm118 = vcmask 58368
    %v119 = vsel %vm118, %v117, 0.0
    %120 = vadd.xlane.f32.xlu0 %v119
    %v121 = vpop.xlane.xlu0 %120
    %v122 = vadd.f32 %v121, %v82
    %v123 = vxor.u32 %v122, 2147483648
    %v124 = vmul.f32 %v123, 1.442695
    %v125 = vpow.pop %v124
    %v126 = vadd.f32 %v125, 1.0
    %v127 = vrcp.pop %v126
    %v128 = vmul.f32 %v126, %v127
    %v129 = vsub.f32 1.0, %v128
    %v130 = vmul.f32 %v127, %v129
    %v131 = vadd.f32 %v127, %v130
    %vm132 = vweird.f32 %v126
    %vm133 = vweird.f32 %v127
    %vm134 = vmor %vm132, %vm133
    %v135 = vsel %vm134, %v127, %v131
    %v136 = vand.u32 2147483647, %v126
    %vm137 = vcmp.eq.f32.partialorder %v136, 8.507059e+37
    %v138 = vand.u32 %v126, 2147483648
    %v139 = vor.u32 1.1754944e-38, %v138
    %v140 = vsel %vm137, %v139, %v135
    %v141 = vmul.f32 1.0, %v140
    %v142 = vld [vmem:[#allocation3] sm:$0xff]
    %v143 = vld [vmem:[#allocation3 + $0x8] sm:$0xff]
    %v144 = vld [vmem:[#allocation8] sm:$0xff]
    %v145 = vld [vmem:[#allocation8 + $0x8] sm:$0xff]
    %v146 = vld [vmem:[#allocation8 + $0x10] sm:$0xff]
    %v147 = vld [vmem:[#allocation8 + $0x18] sm:$0xff]
    %v148 = vperm.slane %v77, 0
    %vm149 = vcmask 261120
    %v151 = vsel %vm149, %v142, 0
    %v154 = vsel %vm149, %v143, 0
    %156 = vmatpush.msra.mxu0 0.0
    %157 = vmatpush.msra.mxu0 0.0
    %158 = vmatpush.msra.mxu0 0.0
    %159 = vmatpush.msra.mxu0 0.0
    %160 = vmatpush.msra.mxu0 0.0
    %161 = vmatpush.msra.mxu0 0.0
    %162 = vmatpush.msra.mxu0 0.0
    %163 = vmatpush.msra.mxu0 0.0
    %164 = vmatpush.msra.mxu0 0.0
    %165 = vmatpush.msra.mxu0 0.0
    %166 = vmatpush.msra.mxu0 0.0
    %167 = vmatpush.msra.mxu0 0.0
    %168 = vmatpush.msra.mxu0 %v147
    %169 = vmatpush.msra.mxu0 %v146
    %170 = vmatpush.msra.mxu0 %v145
    %171 = vmatpush.msra.mxu0 %v144
    %172 = vmatmul.f32.gmra.mxu0 %v151
    %v173 = vpop.f32.mrf.mxu0
    %v174 = vadd.f32 %v148, %v173
    %175 = vmatmul.f32.gmra.mxu0 %v154
    %v176 = vpop.f32.mrf.mxu0
    %v177 = vadd.f32 %v148, %v176
    %178 = vdwg.mxu0
    %vm179 = vcmask 785408
    %180 = vst.msk [vmem:[#allocation2] sm:$0xff] %vm179, %v174
    %181 = vst.msk [vmem:[#allocation2 + $0x8] sm:$0xff] %vm179, %v177
    %v182 = vld [vmem:[#allocation2] sm:$0xff]
    %184 = vrot.lane.b32.xlu0 %v182, 96
    %v185 = vpop.permute.xlu0 %184
    %vm186 = vcmask 64512
    %v187 = vsel %vm186, %v182, 0
    %v189 = vsel %vm186, %v185, 0
    %191 = vmatpush.xpose.msra.mxu0 0.0
    %192 = vmatpush.xpose.msra.mxu0 0.0
    %193 = vmatpush.xpose.msra.mxu0 0.0
    %194 = vmatpush.xpose.msra.mxu0 0.0
    %195 = vmatpush.xpose.msra.mxu0 0.0
    %196 = vmatpush.xpose.msra.mxu0 0.0
    %197 = vmatpush.xpose.msra.mxu0 0.0
    %198 = vmatpush.xpose.msra.mxu0 0.0
    %199 = vmatpush.xpose.msra.mxu0 0.0
    %200 = vmatpush.xpose.msra.mxu0 0.0
    %201 = vmatpush.xpose.msra.mxu0 0.0
    %202 = vmatpush.xpose.msra.mxu0 0.0
    %203 = vmatpush.xpose.msra.mxu0 0.0
    %204 = vmatpush.xpose.msra.mxu0 0.0
    %205 = vmatpush.xpose.msra.mxu0 0.0
    %206 = vmatpush.xpose.msra.mxu0 %v189
    %207 = vmatmul.f32.gmra.mxu0 %v187
    %v208 = vpop.f32.mrf.mxu0
    %v209 = vadd.f32 0.0, %v208
    %210 = vdwg.mxu0
    %v211 = vsel %vm186, %v209, -inf
    %212 = vmax.xlane.f32.xlu0 %v211
    %v213 = vpop.xlane.xlu0 %212
    %v214 = vsub.f32 %v209, %v213
    %v215 = vmul.f32 %v214, 1.442695
    %v216 = vpow.pop %v215
    %v217 = vsel %vm186, %v216, 0.0
    %218 = vadd.xlane.f32.xlu0 %v217
    %v219 = vpop.xlane.xlu0 %218
    %v220 = vrcp.pop %v219
    %v221 = vmul.f32 %v219, %v220
    %v222 = vsub.f32 2.0, %v221
    %v223 = vmul.f32 %v220, %v222
    %v224 = vmul.f32 %v216, %v223
    %225 = vrot.lane.b32.xlu0 %v182, 64
    %v226 = vpop.permute.xlu0 %225
    %v229 = vsel %vm186, %v224, 0
    %231 = vmatpush.msra.mxu0 0.0
    %232 = vmatpush.msra.mxu0 0.0
    %233 = vmatpush.msra.mxu0 0.0
    %234 = vmatpush.msra.mxu0 0.0
    %235 = vmatpush.msra.mxu0 0.0
    %236 = vmatpush.msra.mxu0 0.0
    %237 = vmatpush.msra.mxu0 0.0
    %238 = vmatpush.msra.mxu0 0.0
    %239 = vmatpush.msra.mxu0 0.0
    %240 = vmatpush.msra.mxu0 0.0
    %241 = vmatpush.msra.mxu0 0.0
    %242 = vmatpush.msra.mxu0 0.0
    %243 = vmatpush.msra.mxu0 0.0
    %244 = vmatpush.msra.mxu0 0.0
    %245 = vmatpush.msra.mxu0 0.0
    %246 = vmatpush.msra.mxu0 %v226
    %247 = vmatmul.f32.gmra.mxu0 %v229
    %v248 = vpop.f32.mrf.mxu0
    %v249 = vadd.f32 0.0, %v248
    %250 = vdwg.mxu0
    %v251 = vld [vmem:[#allocation8] sm:$0xff]
    %252 = vrot.lane.b32.xlu0 %v182, 120
    %v253 = vpop.permute.xlu0 %252
    %254 = vrot.lane.b32.xlu0 %v182, 88
    %v255 = vpop.permute.xlu0 %254
    %v256 = vsel %vm186, %v253, 0
    %v258 = vsel %vm186, %v255, 0
    %260 = vmatpush.xpose.msra.mxu0 0.0
    %261 = vmatpush.xpose.msra.mxu0 0.0
    %262 = vmatpush.xpose.msra.mxu0 0.0
    %263 = vmatpush.xpose.msra.mxu0 0.0
    %264 = vmatpush.xpose.msra.mxu0 0.0
    %265 = vmatpush.xpose.msra.mxu0 0.0
    %266 = vmatpush.xpose.msra.mxu0 0.0
    %267 = vmatpush.xpose.msra.mxu0 0.0
    %268 = vmatpush.xpose.msra.mxu0 0.0
    %269 = vmatpush.xpose.msra.mxu0 0.0
    %270 = vmatpush.xpose.msra.mxu0 0.0
    %271 = vmatpush.xpose.msra.mxu0 0.0
    %272 = vmatpush.xpose.msra.mxu0 0.0
    %273 = vmatpush.xpose.msra.mxu0 0.0
    %274 = vmatpush.xpose.msra.mxu0 0.0
    %275 = vmatpush.xpose.msra.mxu0 %v258
    %276 = vmatmul.f32.gmra.mxu0 %v256
    %v277 = vpop.f32.mrf.mxu0
    %v278 = vadd.f32 0.0, %v277
    %279 = vdwg.mxu0
    %v280 = vsel %vm186, %v278, -inf
    %281 = vmax.xlane.f32.xlu0 %v280
    %v282 = vpop.xlane.xlu0 %281
    %v283 = vsub.f32 %v278, %v282
    %v284 = vmul.f32 %v283, 1.442695
    %v285 = vpow.pop %v284
    %v286 = vsel %vm186, %v285, 0.0
    %287 = vadd.xlane.f32.xlu0 %v286
    %v288 = vpop.xlane.xlu0 %287
    %v289 = vrcp.pop %v288
    %v290 = vmul.f32 %v288, %v289
    %v291 = vsub.f32 2.0, %v290
    %v292 = vmul.f32 %v289, %v291
    %v293 = vmul.f32 %v285, %v292
    %294 = vrot.lane.b32.xlu0 %v182, 56
    %v295 = vpop.permute.xlu0 %294
    %v298 = vsel %vm186, %v293, 0
    %300 = vmatpush.msra.mxu0 0.0
    %301 = vmatpush.msra.mxu0 0.0
    %302 = vmatpush.msra.mxu0 0.0
    %303 = vmatpush.msra.mxu0 0.0
    %304 = vmatpush.msra.mxu0 0.0
    %305 = vmatpush.msra.mxu0 0.0
    %306 = vmatpush.msra.mxu0 0.0
    %307 = vmatpush.msra.mxu0 0.0
    %308 = vmatpush.msra.mxu0 0.0
    %309 = vmatpush.msra.mxu0 0.0
    %310 = vmatpush.msra.mxu0 0.0
    %311 = vmatpush.msra.mxu0 0.0
    %312 = vmatpush.msra.mxu0 0.0
    %313 = vmatpush.msra.mxu0 0.0
    %314 = vmatpush.msra.mxu0 0.0
    %315 = vmatpush.msra.mxu0 %v295
    %316 = vmatmul.f32.gmra.mxu0 %v298
    %v317 = vpop.f32.mrf.mxu0
    %v318 = vadd.f32 0.0, %v317
    %319 = vdwg.mxu0
    %v320 = vld [vmem:[#allocation8 + $0x8] sm:$0xff]
    %322 = vrot.lane.b32.xlu0 %v320, 32
    %v323 = vpop.permute.xlu0 %322
    %v326 = vsel %vm186, %v318, 0
    %328 = vmatpush.msra.mxu0 0.0
    %329 = vmatpush.msra.mxu0 0.0
    %330 = vmatpush.msra.mxu0 0.0
    %331 = vmatpush.msra.mxu0 0.0
    %332 = vmatpush.msra.mxu0 0.0
    %333 = vmatpush.msra.mxu0 0.0
    %334 = vmatpush.msra.mxu0 0.0
    %335 = vmatpush.msra.mxu0 0.0
    %336 = vmatpush.msra.mxu0 0.0
    %337 = vmatpush.msra.mxu0 0.0
    %338 = vmatpush.msra.mxu0 0.0
    %339 = vmatpush.msra.mxu0 0.0
    %340 = vmatpush.msra.mxu0 0.0
    %341 = vmatpush.msra.mxu0 0.0
    %342 = vmatpush.msra.mxu0 0.0
    %343 = vmatpush.msra.mxu0 %v323
    %344 = vmatmul.f32.gmra.mxu0 %v326
    %v345 = vpop.f32.mrf.mxu0
    %v346 = vadd.f32 0.0, %v345
    %347 = vdwg.mxu0
    %349 = vrot.lane.b32.xlu0 %v251, 32
    %v350 = vpop.permute.xlu0 %349
    %v353 = vsel %vm186, %v249, 0
    %355 = vmatpush.msra.mxu0 0.0
    %356 = vmatpush.msra.mxu0 0.0
    %357 = vmatpush.msra.mxu0 0.0
    %358 = vmatpush.msra.mxu0 0.0
    %359 = vmatpush.msra.mxu0 0.0
    %360 = vmatpush.msra.mxu0 0.0
    %361 = vmatpush.msra.mxu0 0.0
    %362 = vmatpush.msra.mxu0 0.0
    %363 = vmatpush.msra.mxu0 0.0
    %364 = vmatpush.msra.mxu0 0.0
    %365 = vmatpush.msra.mxu0 0.0
    %366 = vmatpush.msra.mxu0 0.0
    %367 = vmatpush.msra.mxu0 0.0
    %368 = vmatpush.msra.mxu0 0.0
    %369 = vmatpush.msra.mxu0 0.0
    %370 = vmatpush.msra.mxu0 %v350
    %371 = vmatmul.f32.gmra.mxu0 %v353
    %v372 = vpop.f32.mrf.mxu0
    %v373 = vadd.f32 %v346, %v372
    %374 = vdwg.mxu0
    %375 = vrot.lane.b32.xlu0 %v182, 112
    %v376 = vpop.permute.xlu0 %375
    %377 = vrot.lane.b32.xlu0 %v182, 80
    %v378 = vpop.permute.xlu0 %377
    %v379 = vsel %vm186, %v376, 0
    %v381 = vsel %vm186, %v378, 0
    %383 = vmatpush.xpose.msra.mxu0 0.0
    %384 = vmatpush.xpose.msra.mxu0 0.0
    %385 = vmatpush.xpose.msra.mxu0 0.0
    %386 = vmatpush.xpose.msra.mxu0 0.0
    %387 = vmatpush.xpose.msra.mxu0 0.0
    %388 = vmatpush.xpose.msra.mxu0 0.0
    %389 = vmatpush.xpose.msra.mxu0 0.0
    %390 = vmatpush.xpose.msra.mxu0 0.0
    %391 = vmatpush.xpose.msra.mxu0 0.0
    %392 = vmatpush.xpose.msra.mxu0 0.0
    %393 = vmatpush.xpose.msra.mxu0 0.0
    %394 = vmatpush.xpose.msra.mxu0 0.0
    %395 = vmatpush.xpose.msra.mxu0 0.0
    %396 = vmatpush.xpose.msra.mxu0 0.0
    %397 = vmatpush.xpose.msra.mxu0 0.0
    %398 = vmatpush.xpose.msra.mxu0 %v381
    %399 = vmatmul.f32.gmra.mxu0 %v379
    %v400 = vpop.f32.mrf.mxu0
    %v401 = vadd.f32 0.0, %v400
    %402 = vdwg.mxu0
    %v403 = vsel %vm186, %v401, -inf
    %404 = vmax.xlane.f32.xlu0 %v403
    %v405 = vpop.xlane.xlu0 %404
    %v406 = vsub.f32 %v401, %v405
    %v407 = vmul.f32 %v406, 1.442695
    %v408 = vpow.pop %v407
    %v409 = vsel %vm186, %v408, 0.0
    %410 = vadd.xlane.f32.xlu0 %v409
    %v411 = vpop.xlane.xlu0 %410
    %v412 = vrcp.pop %v411
    %v413 = vmul.f32 %v411, %v412
    %v414 = vsub.f32 2.0, %v413
    %v415 = vmul.f32 %v412, %v414
    %v416 = vmul.f32 %v408, %v415
    %417 = vrot.lane.b32.xlu0 %v182, 48
    %v418 = vpop.permute.xlu0 %417
    %v421 = vsel %vm186, %v416, 0
    %423 = vmatpush.msra.mxu0 0.0
    %424 = vmatpush.msra.mxu0 0.0
    %425 = vmatpush.msra.mxu0 0.0
    %426 = vmatpush.msra.mxu0 0.0
    %427 = vmatpush.msra.mxu0 0.0
    %428 = vmatpush.msra.mxu0 0.0
    %429 = vmatpush.msra.mxu0 0.0
    %430 = vmatpush.msra.mxu0 0.0
    %431 = vmatpush.msra.mxu0 0.0
    %432 = vmatpush.msra.mxu0 0.0
    %433 = vmatpush.msra.mxu0 0.0
    %434 = vmatpush.msra.mxu0 0.0
    %435 = vmatpush.msra.mxu0 0.0
    %436 = vmatpush.msra.mxu0 0.0
    %437 = vmatpush.msra.mxu0 0.0
    %438 = vmatpush.msra.mxu0 %v418
    %439 = vmatmul.f32.gmra.mxu0 %v421
    %v440 = vpop.f32.mrf.mxu0
    %v441 = vadd.f32 0.0, %v440
    %442 = vdwg.mxu0
    %v443 = vld [vmem:[#allocation8 + $0x10] sm:$0xff]
    %445 = vrot.lane.b32.xlu0 %v443, 32
    %v446 = vpop.permute.xlu0 %445
    %v449 = vsel %vm186, %v441, 0
    %451 = vmatpush.msra.mxu0 0.0
    %452 = vmatpush.msra.mxu0 0.0
    %453 = vmatpush.msra.mxu0 0.0
    %454 = vmatpush.msra.mxu0 0.0
    %455 = vmatpush.msra.mxu0 0.0
    %456 = vmatpush.msra.mxu0 0.0
    %457 = vmatpush.msra.mxu0 0.0
    %458 = vmatpush.msra.mxu0 0.0
    %459 = vmatpush.msra.mxu0 0.0
    %460 = vmatpush.msra.mxu0 0.0
    %461 = vmatpush.msra.mxu0 0.0
    %462 = vmatpush.msra.mxu0 0.0
    %463 = vmatpush.msra.mxu0 0.0
    %464 = vmatpush.msra.mxu0 0.0
    %465 = vmatpush.msra.mxu0 0.0
    %466 = vmatpush.msra.mxu0 %v446
    %467 = vmatmul.f32.gmra.mxu0 %v449
    %v468 = vpop.f32.mrf.mxu0
    %v469 = vadd.f32 0.0, %v468
    %470 = vdwg.mxu0
    %v471 = vadd.f32 %v373, %v469
    %472 = vrot.lane.b32.xlu0 %v182, 104
    %v473 = vpop.permute.xlu0 %472
    %474 = vrot.lane.b32.xlu0 %v182, 72
    %v475 = vpop.permute.xlu0 %474
    %v476 = vsel %vm186, %v473, 0
    %v478 = vsel %vm186, %v475, 0
    %480 = vmatpush.xpose.msra.mxu0 0.0
    %481 = vmatpush.xpose.msra.mxu0 0.0
    %482 = vmatpush.xpose.msra.mxu0 0.0
    %483 = vmatpush.xpose.msra.mxu0 0.0
    %484 = vmatpush.xpose.msra.mxu0 0.0
    %485 = vmatpush.xpose.msra.mxu0 0.0
    %486 = vmatpush.xpose.msra.mxu0 0.0
    %487 = vmatpush.xpose.msra.mxu0 0.0
    %488 = vmatpush.xpose.msra.mxu0 0.0
    %489 = vmatpush.xpose.msra.mxu0 0.0
    %490 = vmatpush.xpose.msra.mxu0 0.0
    %491 = vmatpush.xpose.msra.mxu0 0.0
    %492 = vmatpush.xpose.msra.mxu0 0.0
    %493 = vmatpush.xpose.msra.mxu0 0.0
    %494 = vmatpush.xpose.msra.mxu0 0.0
    %495 = vmatpush.xpose.msra.mxu0 %v478
    %496 = vmatmul.f32.gmra.mxu0 %v476
    %v497 = vpop.f32.mrf.mxu0
    %v498 = vadd.f32 0.0, %v497
    %499 = vdwg.mxu0
    %v500 = vsel %vm186, %v498, -inf
    %501 = vmax.xlane.f32.xlu0 %v500
    %v502 = vpop.xlane.xlu0 %501
    %v503 = vsub.f32 %v498, %v502
    %v504 = vmul.f32 %v503, 1.442695
    %v505 = vpow.pop %v504
    %v506 = vsel %vm186, %v505, 0.0
    %507 = vadd.xlane.f32.xlu0 %v506
    %v508 = vpop.xlane.xlu0 %507
    %v509 = vrcp.pop %v508
    %v510 = vmul.f32 %v508, %v509
    %v511 = vsub.f32 2.0, %v510
    %v512 = vmul.f32 %v509, %v511
    %v513 = vmul.f32 %v505, %v512
    %514 = vrot.lane.b32.xlu0 %v182, 40
    %v515 = vpop.permute.xlu0 %514
    %v518 = vsel %vm186, %v513, 0
    %520 = vmatpush.msra.mxu0 0.0
    %521 = vmatpush.msra.mxu0 0.0
    %522 = vmatpush.msra.mxu0 0.0
    %523 = vmatpush.msra.mxu0 0.0
    %524 = vmatpush.msra.mxu0 0.0
    %525 = vmatpush.msra.mxu0 0.0
    %526 = vmatpush.msra.mxu0 0.0
    %527 = vmatpush.msra.mxu0 0.0
    %528 = vmatpush.msra.mxu0 0.0
    %529 = vmatpush.msra.mxu0 0.0
    %530 = vmatpush.msra.mxu0 0.0
    %531 = vmatpush.msra.mxu0 0.0
    %532 = vmatpush.msra.mxu0 0.0
    %533 = vmatpush.msra.mxu0 0.0
    %534 = vmatpush.msra.mxu0 0.0
    %535 = vmatpush.msra.mxu0 %v515
    %536 = vmatmul.f32.gmra.mxu0 %v518
    %v537 = vpop.f32.mrf.mxu0
    %v538 = vadd.f32 0.0, %v537
    %539 = vdwg.mxu0
    %v540 = vld [vmem:[#allocation8 + $0x18] sm:$0xff]
    %542 = vrot.lane.b32.xlu0 %v540, 32
    %v543 = vpop.permute.xlu0 %542
    %v546 = vsel %vm186, %v538, 0
    %548 = vmatpush.msra.mxu0 0.0
    %549 = vmatpush.msra.mxu0 0.0
    %550 = vmatpush.msra.mxu0 0.0
    %551 = vmatpush.msra.mxu0 0.0
    %552 = vmatpush.msra.mxu0 0.0
    %553 = vmatpush.msra.mxu0 0.0
    %554 = vmatpush.msra.mxu0 0.0
    %555 = vmatpush.msra.mxu0 0.0
    %556 = vmatpush.msra.mxu0 0.0
    %557 = vmatpush.msra.mxu0 0.0
    %558 = vmatpush.msra.mxu0 0.0
    %559 = vmatpush.msra.mxu0 0.0
    %560 = vmatpush.msra.mxu0 0.0
    %561 = vmatpush.msra.mxu0 0.0
    %562 = vmatpush.msra.mxu0 0.0
    %563 = vmatpush.msra.mxu0 %v543
    %564 = vmatmul.f32.gmra.mxu0 %v546
    %v565 = vpop.f32.mrf.mxu0
    %v566 = vadd.f32 0.0, %v565
    %567 = vdwg.mxu0
    %v568 = vadd.f32 %v471, %v566
    %570 = vrot.lane.b32.xlu0 %v148, 32
    %v571 = vpop.permute.xlu0 %570
    %v573 = vadd.f32 %v568, %v571
    %575 = vrot.lane.b32.xlu0 %v141, 56
    %v576 = vpop.permute.xlu0 %575
    %s577 = vtos %v576
    %v578 = vstv %s577
    %v580 = vmul.f32 %v573, %v578
    %v581 = vld [vmem:[#allocation3] sm:$0xff]
    %v582 = vadd.f32 %v581, %v580
    %v583 = vsel %vm149, %v582, 0.0
    %584 = vadd.xlane.f32.xlu0 %v583
    %v585 = vpop.xlane.xlu0 %584
    %v586 = vrcp.pop 32.0
    %v587 = vmul.f32 32.0, %v586
    %v588 = vsub.f32 1.0, %v587
    %v589 = vmul.f32 %v586, %v588
    %v590 = vadd.f32 %v586, %v589
    %vm591 = vweird.f32 %v586
    %v592 = vsel %vm591, %v586, %v590
    %v593 = vmul.f32 %v585, %v592
    %v594 = vsub.f32 %v582, %v593
    %v595 = vmul.f32 %v594, %v594
    %v596 = vsel %vm149, %v595, 0.0
    %597 = vadd.xlane.f32.xlu0 %v596
    %v598 = vpop.xlane.xlu0 %597
    %v599 = vmul.f32 %v598, %v592
    %v600 = vadd.f32 %v599, 1e-05
    %v601 = vrsqrt.pop %v600
    %v602 = vmul.f32 %v601, %v600
    %v603 = vmul.f32 %v602, %v601
    %v604 = vmul.f32 0.5, %v603
    %v605 = vsub.f32 1.5, %v604
    %v606 = vmul.f32 %v601, %v605
    %vm607 = vweird.f32 %v600
    %vm608 = vweird.f32 %v601
    %vm609 = vmor %vm607, %vm608
    %v610 = vsel %vm609, %v601, %v606
    %v611 = vmul.f32 %v594, %v610
    %v612 = vmul.f32 %v611, %v82
    %613 = vrot.lane.b32.xlu0 %v82, 96
    %v614 = vpop.permute.xlu0 %613
    %v616 = vadd.f32 %v612, %v614
    %617 = vst.msk [vmem:[#allocation11] sm:$0xff] %vm149, %v616
    %v618 = vld [vmem:[#allocation2 + $0x8] sm:$0xff]
    %620 = vrot.lane.b32.xlu0 %v618, 96
    %v621 = vpop.permute.xlu0 %620
    %v622 = vsel %vm186, %v618, 0
    %v624 = vsel %vm186, %v621, 0
    %626 = vmatpush.xpose.msra.mxu0 0.0
    %627 = vmatpush.xpose.msra.mxu0 0.0
    %628 = vmatpush.xpose.msra.mxu0 0.0
    %629 = vmatpush.xpose.msra.mxu0 0.0
    %630 = vmatpush.xpose.msra.mxu0 0.0
    %631 = vmatpush.xpose.msra.mxu0 0.0
    %632 = vmatpush.xpose.msra.mxu0 0.0
    %633 = vmatpush.xpose.msra.mxu0 0.0
    %634 = vmatpush.xpose.msra.mxu0 0.0
    %635 = vmatpush.xpose.msra.mxu0 0.0
    %636 = vmatpush.xpose.msra.mxu0 0.0
    %637 = vmatpush.xpose.msra.mxu0 0.0
    %638 = vmatpush.xpose.msra.mxu0 0.0
    %639 = vmatpush.xpose.msra.mxu0 0.0
    %640 = vmatpush.xpose.msra.mxu0 0.0
    %641 = vmatpush.xpose.msra.mxu0 %v624
    %642 = vmatmul.f32.gmra.mxu0 %v622
    %v643 = vpop.f32.mrf.mxu0
    %v644 = vadd.f32 0.0, %v643
    %645 = vdwg.mxu0
    %v646 = vsel %vm186, %v644, -inf
    %647 = vmax.xlane.f32.xlu0 %v646
    %v648 = vpop.xlane.xlu0 %647
    %v649 = vsub.f32 %v644, %v648
    %v650 = vmul.f32 %v649, 1.442695
    %v651 = vpow.pop %v650
    %v652 = vsel %vm186, %v651, 0.0
    %653 = vadd.xlane.f32.xlu0 %v652
    %v654 = vpop.xlane.xlu0 %653
    %v655 = vrcp.pop %v654
    %v656 = vmul.f32 %v654, %v655
    %v657 = vsub.f32 2.0, %v656
    %v658 = vmul.f32 %v655, %v657
    %v659 = vmul.f32 %v651, %v658
    %660 = vrot.lane.b32.xlu0 %v618, 64
    %v661 = vpop.permute.xlu0 %660
    %v664 = vsel %vm186, %v659, 0
    %666 = vmatpush.msra.mxu0 0.0
    %667 = vmatpush.msra.mxu0 0.0
    %668 = vmatpush.msra.mxu0 0.0
    %669 = vmatpush.msra.mxu0 0.0
    %670 = vmatpush.msra.mxu0 0.0
    %671 = vmatpush.msra.mxu0 0.0
    %672 = vmatpush.msra.mxu0 0.0
    %673 = vmatpush.msra.mxu0 0.0
    %674 = vmatpush.msra.mxu0 0.0
    %675 = vmatpush.msra.mxu0 0.0
    %676 = vmatpush.msra.mxu0 0.0
    %677 = vmatpush.msra.mxu0 0.0
    %678 = vmatpush.msra.mxu0 0.0
    %679 = vmatpush.msra.mxu0 0.0
    %680 = vmatpush.msra.mxu0 0.0
    %681 = vmatpush.msra.mxu0 %v661
    %682 = vmatmul.f32.gmra.mxu0 %v664
    %v683 = vpop.f32.mrf.mxu0
    %v684 = vadd.f32 0.0, %v683
    %685 = vdwg.mxu0
    %v686 = vld [vmem:[#allocation8] sm:$0xff]
    %687 = vrot.lane.b32.xlu0 %v618, 120
    %v688 = vpop.permute.xlu0 %687
    %689 = vrot.lane.b32.xlu0 %v618, 88
    %v690 = vpop.permute.xlu0 %689
    %v691 = vsel %vm186, %v688, 0
    %v693 = vsel %vm186, %v690, 0
    %695 = vmatpush.xpose.msra.mxu0 0.0
    %696 = vmatpush.xpose.msra.mxu0 0.0
    %697 = vmatpush.xpose.msra.mxu0 0.0
    %698 = vmatpush.xpose.msra.mxu0 0.0
    %699 = vmatpush.xpose.msra.mxu0 0.0
    %700 = vmatpush.xpose.msra.mxu0 0.0
    %701 = vmatpush.xpose.msra.mxu0 0.0
    %702 = vmatpush.xpose.msra.mxu0 0.0
    %703 = vmatpush.xpose.msra.mxu0 0.0
    %704 = vmatpush.xpose.msra.mxu0 0.0
    %705 = vmatpush.xpose.msra.mxu0 0.0
    %706 = vmatpush.xpose.msra.mxu0 0.0
    %707 = vmatpush.xpose.msra.mxu0 0.0
    %708 = vmatpush.xpose.msra.mxu0 0.0
    %709 = vmatpush.xpose.msra.mxu0 0.0
    %710 = vmatpush.xpose.msra.mxu0 %v693
    %711 = vmatmul.f32.gmra.mxu0 %v691
    %v712 = vpop.f32.mrf.mxu0
    %v713 = vadd.f32 0.0, %v712
    %714 = vdwg.mxu0
    %v715 = vsel %vm186, %v713, -inf
    %716 = vmax.xlane.f32.xlu0 %v715
    %v717 = vpop.xlane.xlu0 %716
    %v718 = vsub.f32 %v713, %v717
    %v719 = vmul.f32 %v718, 1.442695
    %v720 = vpow.pop %v719
    %v721 = vsel %vm186, %v720, 0.0
    %722 = vadd.xlane.f32.xlu0 %v721
    %v723 = vpop.xlane.xlu0 %722
    %v724 = vrcp.pop %v723
    %v725 = vmul.f32 %v723, %v724
    %v726 = vsub.f32 2.0, %v725
    %v727 = vmul.f32 %v724, %v726
    %v728 = vmul.f32 %v720, %v727
    %729 = vrot.lane.b32.xlu0 %v618, 56
    %v730 = vpop.permute.xlu0 %729
    %v733 = vsel %vm186, %v728, 0
    %735 = vmatpush.msra.mxu0 0.0
    %736 = vmatpush.msra.mxu0 0.0
    %737 = vmatpush.msra.mxu0 0.0
    %738 = vmatpush.msra.mxu0 0.0
    %739 = vmatpush.msra.mxu0 0.0
    %740 = vmatpush.msra.mxu0 0.0
    %741 = vmatpush.msra.mxu0 0.0
    %742 = vmatpush.msra.mxu0 0.0
    %743 = vmatpush.msra.mxu0 0.0
    %744 = vmatpush.msra.mxu0 0.0
    %745 = vmatpush.msra.mxu0 0.0
    %746 = vmatpush.msra.mxu0 0.0
    %747 = vmatpush.msra.mxu0 0.0
    %748 = vmatpush.msra.mxu0 0.0
    %749 = vmatpush.msra.mxu0 0.0
    %750 = vmatpush.msra.mxu0 %v730
    %751 = vmatmul.f32.gmra.mxu0 %v733
    %v752 = vpop.f32.mrf.mxu0
    %v753 = vadd.f32 0.0, %v752
    %754 = vdwg.mxu0
    %v755 = vld [vmem:[#allocation8 + $0x8] sm:$0xff]
    %757 = vrot.lane.b32.xlu0 %v755, 32
    %v758 = vpop.permute.xlu0 %757
    %v761 = vsel %vm186, %v753, 0
    %763 = vmatpush.msra.mxu0 0.0
    %764 = vmatpush.msra.mxu0 0.0
    %765 = vmatpush.msra.mxu0 0.0
    %766 = vmatpush.msra.mxu0 0.0
    %767 = vmatpush.msra.mxu0 0.0
    %768 = vmatpush.msra.mxu0 0.0
    %769 = vmatpush.msra.mxu0 0.0
    %770 = vmatpush.msra.mxu0 0.0
    %771 = vmatpush.msra.mxu0 0.0
    %772 = vmatpush.msra.mxu0 0.0
    %773 = vmatpush.msra.mxu0 0.0
    %774 = vmatpush.msra.mxu0 0.0
    %775 = vmatpush.msra.mxu0 0.0
    %776 = vmatpush.msra.mxu0 0.0
    %777 = vmatpush.msra.mxu0 0.0
    %778 = vmatpush.msra.mxu0 %v758
    %779 = vmatmul.f32.gmra.mxu0 %v761
    %v780 = vpop.f32.mrf.mxu0
    %v781 = vadd.f32 0.0, %v780
    %782 = vdwg.mxu0
    %784 = vrot.lane.b32.xlu0 %v686, 32
    %v785 = vpop.permute.xlu0 %784
    %v788 = vsel %vm186, %v684, 0
    %790 = vmatpush.msra.mxu0 0.0
    %791 = vmatpush.msra.mxu0 0.0
    %792 = vmatpush.msra.mxu0 0.0
    %793 = vmatpush.msra.mxu0 0.0
    %794 = vmatpush.msra.mxu0 0.0
    %795 = vmatpush.msra.mxu0 0.0
    %796 = vmatpush.msra.mxu0 0.0
    %797 = vmatpush.msra.mxu0 0.0
    %798 = vmatpush.msra.mxu0 0.0
    %799 = vmatpush.msra.mxu0 0.0
    %800 = vmatpush.msra.mxu0 0.0
    %801 = vmatpush.msra.mxu0 0.0
    %802 = vmatpush.msra.mxu0 0.0
    %803 = vmatpush.msra.mxu0 0.0
    %804 = vmatpush.msra.mxu0 0.0
    %805 = vmatpush.msra.mxu0 %v785
    %806 = vmatmul.f32.gmra.mxu0 %v788
    %v807 = vpop.f32.mrf.mxu0
    %v808 = vadd.f32 %v781, %v807
    %809 = vdwg.mxu0
    %810 = vrot.lane.b32.xlu0 %v618, 112
    %v811 = vpop.permute.xlu0 %810
    %812 = vrot.lane.b32.xlu0 %v618, 80
    %v813 = vpop.permute.xlu0 %812
    %v814 = vsel %vm186, %v811, 0
    %v816 = vsel %vm186, %v813, 0
    %818 = vmatpush.xpose.msra.mxu0 0.0
    %819 = vmatpush.xpose.msra.mxu0 0.0
    %820 = vmatpush.xpose.msra.mxu0 0.0
    %821 = vmatpush.xpose.msra.mxu0 0.0
    %822 = vmatpush.xpose.msra.mxu0 0.0
    %823 = vmatpush.xpose.msra.mxu0 0.0
    %824 = vmatpush.xpose.msra.mxu0 0.0
    %825 = vmatpush.xpose.msra.mxu0 0.0
    %826 = vmatpush.xpose.msra.mxu0 0.0
    %827 = vmatpush.xpose.msra.mxu0 0.0
    %828 = vmatpush.xpose.msra.mxu0 0.0
    %829 = vmatpush.xpose.msra.mxu0 0.0
    %830 = vmatpush.xpose.msra.mxu0 0.0
    %831 = vmatpush.xpose.msra.mxu0 0.0
    %832 = vmatpush.xpose.msra.mxu0 0.0
    %833 = vmatpush.xpose.msra.mxu0 %v816
    %834 = vmatmul.f32.gmra.mxu0 %v814
    %v835 = vpop.f32.mrf.mxu0
    %v836 = vadd.f32 0.0, %v835
    %837 = vdwg.mxu0
    %v838 = vsel %vm186, %v836, -inf
    %839 = vmax.xlane.f32.xlu0 %v838
    %v840 = vpop.xlane.xlu0 %839
    %v841 = vsub.f32 %v836, %v840
    %v842 = vmul.f32 %v841, 1.442695
    %v843 = vpow.pop %v842
    %v844 = vsel %vm186, %v843, 0.0
    %845 = vadd.xlane.f32.xlu0 %v844
    %v846 = vpop.xlane.xlu0 %845
    %v847 = vrcp.pop %v846
    %v848 = vmul.f32 %v846, %v847
    %v849 = vsub.f32 2.0, %v848
    %v850 = vmul.f32 %v847, %v849
    %v851 = vmul.f32 %v843, %v850
    %852 = vrot.lane.b32.xlu0 %v618, 48
    %v853 = vpop.permute.xlu0 %852
    %v856 = vsel %vm186, %v851, 0
    %858 = vmatpush.msra.mxu0 0.0
    %859 = vmatpush.msra.mxu0 0.0
    %860 = vmatpush.msra.mxu0 0.0
    %861 = vmatpush.msra.mxu0 0.0
    %862 = vmatpush.msra.mxu0 0.0
    %863 = vmatpush.msra.mxu0 0.0
    %864 = vmatpush.msra.mxu0 0.0
    %865 = vmatpush.msra.mxu0 0.0
    %866 = vmatpush.msra.mxu0 0.0
    %867 = vmatpush.msra.mxu0 0.0
    %868 = vmatpush.msra.mxu0 0.0
    %869 = vmatpush.msra.mxu0 0.0
    %870 = vmatpush.msra.mxu0 0.0
    %871 = vmatpush.msra.mxu0 0.0
    %872 = vmatpush.msra.mxu0 0.0
    %873 = vmatpush.msra.mxu0 %v853
    %874 = vmatmul.f32.gmra.mxu0 %v856
    %v875 = vpop.f32.mrf.mxu0
    %v876 = vadd.f32 0.0, %v875
    %877 = vdwg.mxu0
    %v878 = vld [vmem:[#allocation8 + $0x10] sm:$0xff]
    %880 = vrot.lane.b32.xlu0 %v878, 32
    %v881 = vpop.permute.xlu0 %880
    %v884 = vsel %vm186, %v876, 0
    %886 = vmatpush.msra.mxu0 0.0
    %887 = vmatpush.msra.mxu0 0.0
    %888 = vmatpush.msra.mxu0 0.0
    %889 = vmatpush.msra.mxu0 0.0
    %890 = vmatpush.msra.mxu0 0.0
    %891 = vmatpush.msra.mxu0 0.0
    %892 = vmatpush.msra.mxu0 0.0
    %893 = vmatpush.msra.mxu0 0.0
    %894 = vmatpush.msra.mxu0 0.0
    %895 = vmatpush.msra.mxu0 0.0
    %896 = vmatpush.msra.mxu0 0.0
    %897 = vmatpush.msra.mxu0 0.0
    %898 = vmatpush.msra.mxu0 0.0
    %899 = vmatpush.msra.mxu0 0.0
    %900 = vmatpush.msra.mxu0 0.0
    %901 = vmatpush.msra.mxu0 %v881
    %902 = vmatmul.f32.gmra.mxu0 %v884
    %v903 = vpop.f32.mrf.mxu0
    %v904 = vadd.f32 0.0, %v903
    %905 = vdwg.mxu0
    %v906 = vadd.f32 %v808, %v904
    %907 = vrot.lane.b32.xlu0 %v618, 104
    %v908 = vpop.permute.xlu0 %907
    %909 = vrot.lane.b32.xlu0 %v618, 72
    %v910 = vpop.permute.xlu0 %909
    %v911 = vsel %vm186, %v908, 0
    %v913 = vsel %vm186, %v910, 0
    %915 = vmatpush.xpose.msra.mxu0 0.0
    %916 = vmatpush.xpose.msra.mxu0 0.0
    %917 = vmatpush.xpose.msra.mxu0 0.0
    %918 = vmatpush.xpose.msra.mxu0 0.0
    %919 = vmatpush.xpose.msra.mxu0 0.0
    %920 = vmatpush.xpose.msra.mxu0 0.0
    %921 = vmatpush.xpose.msra.mxu0 0.0
    %922 = vmatpush.xpose.msra.mxu0 0.0
    %923 = vmatpush.xpose.msra.mxu0 0.0
    %924 = vmatpush.xpose.msra.mxu0 0.0
    %925 = vmatpush.xpose.msra.mxu0 0.0
    %926 = vmatpush.xpose.msra.mxu0 0.0
    %927 = vmatpush.xpose.msra.mxu0 0.0
    %928 = vmatpush.xpose.msra.mxu0 0.0
    %929 = vmatpush.xpose.msra.mxu0 0.0
    %930 = vmatpush.xpose.msra.mxu0 %v913
    %931 = vmatmul.f32.gmra.mxu0 %v911
    %v932 = vpop.f32.mrf.mxu0
    %v933 = vadd.f32 0.0, %v932
    %934 = vdwg.mxu0
    %v935 = vsel %vm186, %v933, -inf
    %936 = vmax.xlane.f32.xlu0 %v935
    %v937 = vpop.xlane.xlu0 %936
    %v938 = vsub.f32 %v933, %v937
    %v939 = vmul.f32 %v938, 1.442695
    %v940 = vpow.pop %v939
    %v941 = vsel %vm186, %v940, 0.0
    %942 = vadd.xlane.f32.xlu0 %v941
    %v943 = vpop.xlane.xlu0 %942
    %v944 = vrcp.pop %v943
    %v945 = vmul.f32 %v943, %v944
    %v946 = vsub.f32 2.0, %v945
    %v947 = vmul.f32 %v944, %v946
    %v948 = vmul.f32 %v940, %v947
    %949 = vrot.lane.b32.xlu0 %v618, 40
    %v950 = vpop.permute.xlu0 %949
    %v953 = vsel %vm186, %v948, 0
    %955 = vmatpush.msra.mxu0 0.0
    %956 = vmatpush.msra.mxu0 0.0
    %957 = vmatpush.msra.mxu0 0.0
    %958 = vmatpush.msra.mxu0 0.0
    %959 = vmatpush.msra.mxu0 0.0
    %960 = vmatpush.msra.mxu0 0.0
    %961 = vmatpush.msra.mxu0 0.0
    %962 = vmatpush.msra.mxu0 0.0
    %963 = vmatpush.msra.mxu0 0.0
    %964 = vmatpush.msra.mxu0 0.0
    %965 = vmatpush.msra.mxu0 0.0
    %966 = vmatpush.msra.mxu0 0.0
    %967 = vmatpush.msra.mxu0 0.0
    %968 = vmatpush.msra.mxu0 0.0
    %969 = vmatpush.msra.mxu0 0.0
    %970 = vmatpush.msra.mxu0 %v950
    %971 = vmatmul.f32.gmra.mxu0 %v953
    %v972 = vpop.f32.mrf.mxu0
    %v973 = vadd.f32 0.0, %v972
    %974 = vdwg.mxu0
    %v975 = vld [vmem:[#allocation8 + $0x18] sm:$0xff]
    %977 = vrot.lane.b32.xlu0 %v975, 32
    %v978 = vpop.permute.xlu0 %977
    %v981 = vsel %vm186, %v973, 0
    %983 = vmatpush.msra.mxu0 0.0
    %984 = vmatpush.msra.mxu0 0.0
    %985 = vmatpush.msra.mxu0 0.0
    %986 = vmatpush.msra.mxu0 0.0
    %987 = vmatpush.msra.mxu0 0.0
    %988 = vmatpush.msra.mxu0 0.0
    %989 = vmatpush.msra.mxu0 0.0
    %990 = vmatpush.msra.mxu0 0.0
    %991 = vmatpush.msra.mxu0 0.0
    %992 = vmatpush.msra.mxu0 0.0
    %993 = vmatpush.msra.mxu0 0.0
    %994 = vmatpush.msra.mxu0 0.0
    %995 = vmatpush.msra.mxu0 0.0
    %996 = vmatpush.msra.mxu0 0.0
    %997 = vmatpush.msra.mxu0 0.0
    %998 = vmatpush.msra.mxu0 %v978
    %999 = vmatmul.f32.gmra.mxu0 %v981
    %v1000 = vpop.f32.mrf.mxu0
    %v1001 = vadd.f32 0.0, %v1000
    %1002 = vdwg.mxu0
    %v1003 = vadd.f32 %v906, %v1001
    %v1004 = vadd.f32 %v1003, %v571
    %v1005 = vrot.slane %v141, 1
    %1006 = vrot.lane.b32.xlu0 %v1005, 56
    %v1007 = vpop.permute.xlu0 %1006
    %s1008 = vtos %v1007
    %v1009 = vstv %s1008
    %v1011 = vmul.f32 %v1004, %v1009
    %v1012 = vld [vmem:[#allocation3 + $0x8] sm:$0xff]
    %v1013 = vadd.f32 %v1012, %v1011
    %v1014 = vsel %vm149, %v1013, 0.0
    %1015 = vadd.xlane.f32.xlu0 %v1014
    %v1016 = vpop.xlane.xlu0 %1015
    %v1017 = vmul.f32 %v1016, %v592
    %v1018 = vsub.f32 %v1013, %v1017
    %v1019 = vmul.f32 %v1018, %v1018
    %v1020 = vsel %vm149, %v1019, 0.0
    %1021 = vadd.xlane.f32.xlu0 %v1020
    %v1022 = vpop.xlane.xlu0 %1021
    %v1023 = vmul.f32 %v1022, %v592
    %v1024 = vadd.f32 %v1023, 1e-05
    %v1025 = vrsqrt.pop %v1024
    %v1026 = vmul.f32 %v1025, %v1024
    %v1027 = vmul.f32 %v1026, %v1025
    %v1028 = vmul.f32 0.5, %v1027
    %v1029 = vsub.f32 1.5, %v1028
    %v1030 = vmul.f32 %v1025, %v1029
    %vm1031 = vweird.f32 %v1024
    %vm1032 = vweird.f32 %v1025
    %vm1033 = vmor %vm1031, %vm1032
    %v1034 = vsel %vm1033, %v1025, %v1030
    %v1035 = vmul.f32 %v1018, %v1034
    %v1036 = vmul.f32 %v1035, %v82
    %v1037 = vadd.f32 %v1036, %v614
    %1038 = vst.msk [vmem:[#allocation11 + $0x8] sm:$0xff] %vm149, %v1037
    // Predicated region
    $region34: #{entropy_aware_attention.1} parent=1 // pred_check
      _
    $region35: #{entropy_aware_attention.1} parent=1 // pred_check_branch
      %1040 = sbr.rel (0) target = $region37
    $region36: #{entropy_aware_attention.1} parent=1 // pred_region
      %1042 = vsyncadd [#allocation5], 0
      %s1043 = sshll.u32 [#allocation11], 4
      %s1044 = int_to_ptr.vmem [resolvable:$true] %s1043
      %s1045 = sshll.u32 %s4, 4
      %s1046 = int_to_ptr.hbm [resolvable:$true] %s1045
      %1051 = dma.vmem_to_hbm [thread:$0]  %s1044, 256, %s1046, [#allocation5], 128, 128, 8
    $region37: #{entropy_aware_attention.1} parent=1 // pred_fallthru
      _
    // Predicated region
    $region38: #{entropy_aware_attention.1} parent=1 // pred_check
      _
    $region39: #{entropy_aware_attention.1} parent=1 // pred_check_branch
      %1053 = sbr.rel (0) target = $region41
    $region40: #{entropy_aware_attention.1} parent=1 // pred_region
      %1055 = dma.done [#allocation5], 256
    $region41: #{entropy_aware_attention.1} parent=1 // pred_fallthru
      _
    %1056 = vsyncpa [#allocation4], 1
    %1057 = vsyncpa [#allocation7], 1
    %1058 = vsyncpa [#allocation10], 1
    %1059 = vsyncpa [#allocation5], 1

</llo_original>
